<compile_context>
chip_gen: v6e
topology: v6e:2x2x1
jax: 0.10.0
libtpu: 0.0.40
codegen_flags: <defaults>
</compile_context>

<pallas_src>
import functools

import jax
import jax.numpy as jnp
from jax import lax
from jax.experimental import pallas as pl
from jax.experimental.pallas import tpu as pltpu


def _round_up(x, m):
    return ((x + m - 1) // m) * m


def _lane_pad(n):
    return _round_up(n, 128)


def _padded_vmem_bytes(a):
    """Approximate VMEM footprint of a 2-D array under (8/16, 128) tiling."""
    r, c = a.shape
    sub = 16 if a.dtype.itemsize < 4 else 8
    return _round_up(r, sub) * _round_up(c, 128) * a.dtype.itemsize


# ----------------------------------------------------------------------------
# Pallas kernel: fused MLP tower + MF product + output head + sigmoid
# ----------------------------------------------------------------------------
def _neumf_kernel(n_fc, u_ref, i_ref, *refs):
    """refs = [W1_user_ext, W1_item_ext, b1,
               W2, b2, ..., Wn, bn,
               w_out_mlp, w_out_mf_ext, b_out, out_ref].

    u_ref / i_ref are packed (tile_b, e_mlp + e_mf) bf16 slabs holding
    [mlp_embedding | mf_embedding] per row.  W1_*_ext are zero-extended over
    the MF columns, w_out_mf_ext is zero-extended over the MLP columns, so the
    packed slabs are used directly (zero weights kill the unwanted columns).
    """
    out_ref = refs[-1]
    w = refs[:-1]
    f32 = jnp.float32

    u = u_ref[...]                      # (tile_b, e_pack) bf16
    v = i_ref[...]                      # (tile_b, e_pack) bf16

    # First MLP layer: concat([ue_mlp, ie_mlp]) @ W1 + b1 as a split matmul on
    # the packed slabs (no concat, no slicing).
    x = (jnp.dot(u, w[0][...], preferred_element_type=f32)
         + jnp.dot(v, w[1][...], preferred_element_type=f32)
         + w[2][...])
    x = jnp.maximum(x, 0.0)

    # Remaining MLP layers: Linear -> ReLU.  bf16 MXU matmuls with f32
    # accumulation; element-wise math stays f32 (safe on v5e).
    # NOTE: inter-layer activations are recast to bf16 before each matmul --
    # deliberate precision trade-off vs. the f32 reference.
    for l in range(1, n_fc):
        wl = w[1 + 2 * l][...]
        bl = w[2 + 2 * l][...]
        x = jnp.dot(x.astype(wl.dtype), wl, preferred_element_type=f32) + bl
        x = jnp.maximum(x, 0.0)

    # MF branch: element-wise product on the VPU in f32.  The MLP columns of
    # the packed slabs are masked out by the zero-extended output weight.
    mf = u.astype(f32) * v.astype(f32)  # (tile_b, e_pack)

    # Output head, lane-dense: logits computed as (1, F) @ (tile_b, F)^T so the
    # result is a (1, tile_b) row -> full-width unmasked stores, no (tile_b, 1)
    # column layout anywhere.
    w_out_mlp = w[-3][...]              # (1, last_dim) f32
    w_out_mf = w[-2][...]               # (1, e_pack)  f32 (zeros over MLP cols)
    b_out = w[-1][...]                  # (1, 1) f32

    dn = (((1,), (1,)), ((), ()))       # contract both minor dims: A @ B^T
    logits = (lax.dot_general(w_out_mlp, x, dn, preferred_element_type=f32)
              + lax.dot_general(w_out_mf, mf, dn, preferred_element_type=f32)
              + b_out)                  # (1, tile_b)
    out_ref[...] = jax.nn.sigmoid(logits).astype(out_ref.dtype)


# ----------------------------------------------------------------------------
# Wrapper: embedding gathers (glue) + batch-tiled pallas_call
# ----------------------------------------------------------------------------
def neumf_forward(kparams, user_indices, item_indices, *, tile_b=8192):
    """NeuMF forward.  `kparams` comes from pack_neumf_params (one-time prep)."""
    user_table = kparams["user_table"]        # (num_users, e_pack) bf16
    item_table = kparams["item_table"]        # (num_items, e_pack) bf16
    e_pack = int(user_table.shape[1])
    fc_rest = kparams["fc_weights_rest"]      # [W2, ..., Wn]
    fc_bs = kparams["fc_biases"]              # [b1, ..., bn]
    n_fc = len(fc_bs)
    layer_widths = [int(b.shape[1]) for b in fc_bs]
    last_dim = layer_widths[-1]

    B = int(user_indices.shape[0])

    weight_ops = [kparams["w1_user"], kparams["w1_item"], fc_bs[0]]
    for l in range(1, n_fc):
        weight_ops += [fc_rest[l - 1], fc_bs[l]]
    weight_ops += [kparams["w_out_mlp"], kparams["w_out_mf"], kparams["b_out"]]

    # ---- batch tile selection (multiple of 128, as large as VMEM allows) ----
    tile_b = max(128, (int(tile_b) // 128) * 128)
    tile_b = min(tile_b, _round_up(B, 128))

    try:
        vmem_cap = int(pltpu.get_tpu_info().vmem_capacity_bytes)
        vmem_budget = min(vmem_cap * 3 // 4, 100 * 1024 * 1024)
    except Exception:
        vmem_budget = 48 * 1024 * 1024        # safe on v7x's 64 MiB per-TC VMEM

    per_row_bytes = (
        2 * 2 * _lane_pad(e_pack) * 2             # 2 bf16 input slabs, double-buffered
        + 2 * 4                                   # lane-dense f32 output, double-buffered
        + 3 * 4 * _lane_pad(max(layer_widths)))   # f32 intermediate headroom
    weight_bytes = sum(_padded_vmem_bytes(a) for a in weight_ops)
    max_tile = max(
        128,
        ((vmem_budget - weight_bytes - (2 << 20)) // per_row_bytes) // 128 * 128)
    tile_b = min(tile_b, max_tile)

    b_padded = _round_up(B, tile_b)
    grid = (b_padded // tile_b,)

    # Pad only the int32 index vectors (B*4 bytes) -- never the gathered
    # activations; index 0 is always valid and pad rows are sliced off below.
    if b_padded != B:
        user_indices = jnp.pad(user_indices, (0, b_padded - B))
        item_indices = jnp.pad(item_indices, (0, b_padded - B))

    # Embedding lookups stay in plain JAX.
    # TODO(synk): fully fuse the gather via scalar-prefetched indices + manual
    # DMA; embedding rows are only 32-384 bytes, so per-row Pallas DMAs would
    # be descriptor/latency bound and slower than XLA's native gather.
    u_packed = user_table[user_indices]       # (b_padded, e_pack) bf16
    i_packed = item_table[item_indices]       # (b_padded, e_pack) bf16

    act_spec = pl.BlockSpec((tile_b, e_pack), lambda i: (i, 0))
    in_specs = [act_spec, act_spec] + [
        # Constant index map -> weights stay VMEM-resident across grid steps.
        pl.BlockSpec(a.shape, lambda i: (0, 0)) for a in weight_ops]

    mm_macs = (2 * e_pack * layer_widths[0]
               + sum(layer_widths[l - 1] * layer_widths[l] for l in range(1, n_fc))
               + last_dim + 2 * e_pack)
    cost = pl.CostEstimate(
        flops=int(2 * b_padded * mm_macs),
        transcendentals=int(b_padded),
        bytes_accessed=int(u_packed.nbytes + i_packed.nbytes + b_padded * 4
                           + sum(int(a.nbytes) for a in weight_ops)),
    )

    out = pl.pallas_call(
        functools.partial(_neumf_kernel, n_fc),
        grid=grid,
        out_shape=jax.ShapeDtypeStruct((1, b_padded), jnp.float32),
        in_specs=in_specs,
        out_specs=pl.BlockSpec((1, tile_b), lambda i: (0, i)),
        compiler_params=pltpu.CompilerParams(
            dimension_semantics=("parallel",),    # shard batch grid over TCs (v7x)
            vmem_limit_bytes=int(vmem_budget),
        ),
        cost_estimate=cost,
    )(u_packed, i_packed, *weight_ops)

    return out.reshape(-1)[:B]                # matches torch .squeeze()


# ----------------------------------------------------------------------------
# One-time parameter packing for the kernel layout
# ----------------------------------------------------------------------------
def pack_neumf_params(params):
    """Merge per-side MLP+MF embedding tables into one lane-dense table,
    zero-extend the first FC weight over the MF columns, and pre-split /
    zero-extend the output head.  Done once, outside the forward pass."""
    e_mlp = params["embedding_user_mlp"].shape[1]
    e_mf = params["embedding_user_mf"].shape[1]
    fc_ws = params["fc_weights"]
    last_dim = fc_ws[-1].shape[1]

    user_table = jnp.concatenate(
        [params["embedding_user_mlp"], params["embedding_user_mf"]], axis=-1)
    item_table = jnp.concatenate(
        [params["embedding_item_mlp"], params["embedding_item_mf"]], axis=-1)

    w1 = fc_ws[0]                             # (2*e_mlp, L1)
    zeros_mf = jnp.zeros((e_mf, w1.shape[1]), w1.dtype)
    w1_user = jnp.concatenate([w1[:e_mlp], zeros_mf], axis=0)   # (e_pack, L1)
    w1_item = jnp.concatenate([w1[e_mlp:], zeros_mf], axis=0)   # (e_pack, L1)

    w_out = params["output_weight"].astype(jnp.float32)         # (last+e_mf, 1)
    w_out_mlp = w_out[:last_dim].T                              # (1, last_dim)
    w_out_mf = jnp.concatenate(
        [jnp.zeros((1, e_mlp), jnp.float32), w_out[last_dim:].T], axis=-1)

    return dict(
        user_table=user_table, item_table=item_table,
        w1_user=w1_user, w1_item=w1_item,
        fc_weights_rest=list(fc_ws[1:]),
        fc_biases=list(params["fc_biases"]),
        w_out_mlp=w_out_mlp, w_out_mf=w_out_mf,
        b_out=params["output_bias"].astype(jnp.float32),
    )


# ----------------------------------------------------------------------------
# Deterministic parameter construction (mirrors NeuMF.__init__ / init_weight)
# ----------------------------------------------------------------------------
def xavier_uniform(key, shape_in_out):
    fan_in, fan_out = shape_in_out
    bound = jnp.sqrt(6.0 / (fan_in + fan_out))
    return jax.random.uniform(
        key, (fan_in, fan_out), minval=-bound, maxval=bound, dtype=jnp.float32)


def make_params(key, num_users, num_items, factor_num, layers, *,
                dtype=jnp.bfloat16, nonzero_bias=False):
    """nonzero_bias=True only strengthens the self-test (forward math identical;
    the PyTorch module zero-inits biases)."""
    embed_size_mlp = layers[0] // 2
    n_fc = len(layers) - 1
    keys = iter(jax.random.split(key, 4 + 2 * n_fc + 2))
    nk = lambda: next(keys)

    params = {
        "embedding_user_mlp": (0.01 * jax.random.normal(
            nk(), (num_users, embed_size_mlp), jnp.float32)).astype(dtype),
        "embedding_item_mlp": (0.01 * jax.random.normal(
            nk(), (num_items, embed_size_mlp), jnp.float32)).astype(dtype),
        "embedding_user_mf": (0.01 * jax.random.normal(
            nk(), (num_users, factor_num), jnp.float32)).astype(dtype),
        "embedding_item_mf": (0.01 * jax.random.normal(
            nk(), (num_items, factor_num), jnp.float32)).astype(dtype),
        "fc_weights": [],
        "fc_biases": [],
    }
    for in_size, out_size in zip(layers[:-1], layers[1:]):
        params["fc_weights"].append(
            xavier_uniform(nk(), (in_size, out_size)).astype(dtype))
        bkey = nk()
        if nonzero_bias:
            params["fc_biases"].append(
                0.1 * jax.random.normal(bkey, (1, out_size), jnp.float32))
        else:
            params["fc_biases"].append(jnp.zeros((1, out_size), jnp.float32))
    params["output_weight"] = xavier_uniform(
        nk(), (layers[-1] + factor_num, 1)).astype(dtype)
    obkey = nk()
    if nonzero_bias:
        params["output_bias"] = 0.1 * jax.random.normal(obkey, (1, 1), jnp.float32)
    else:
        params["output_bias"] = jnp.zeros((1, 1), jnp.float32)
    return params


# ----------------------------------------------------------------------------
# Pure-JAX reference (f32 math on the same bf16-stored parameters)
# ----------------------------------------------------------------------------
def neumf_reference(params, user_indices, item_indices):
    f32 = jnp.float32
    ue_mlp = params["embedding_user_mlp"][user_indices].astype(f32)
    ie_mlp = params["embedding_item_mlp"][item_indices].astype(f32)
    ue_mf = params["embedding_user_mf"][user_indices].astype(f32)
    ie_mf = params["embedding_item_mf"][item_indices].astype(f32)
    x = jnp.concatenate([ue_mlp, ie_mlp], axis=-1)
    mf = ue_mf * ie_mf
    for w, b in zip(params["fc_weights"], params["fc_biases"]):
        x = jnp.maximum(x @ w.astype(f32) + b, 0.0)
    vec = jnp.concatenate([x, mf], axis=-1)
    logits = vec @ params["output_weight"].astype(f32) + params["output_bias"]
    return jnp.squeeze(jax.nn.sigmoid(logits))


if __name__ == "__main__":
    # Small, NeuMF-consistent config.
    num_users, num_items = 64, 96
    factor_num = 8                 # args.factor_num  (MF embedding size)
    layers = [16, 32, 16, 8]       # args.layers      (MLP tower sizes)
    batch = 200                    # non-multiple of 128 -> exercises index padding

    key = jax.random.PRNGKey(0)
    pkey, ukey, ikey = jax.random.split(key, 3)
    params = make_params(pkey, num_users, num_items, factor_num, layers,
                         dtype=jnp.bfloat16, nonzero_bias=True)
    kparams = pack_neumf_params(params)      # one-time layout prep

    user_indices = jax.random.randint(ukey, (batch,), 0, num_users, dtype=jnp.int32)
    item_indices = jax.random.randint(ikey, (batch,), 0, num_items, dtype=jnp.int32)

    # Default tile_b=8192 auto-clamps to 256 for this tiny batch.
    rating = neumf_forward(kparams, user_indices, item_indices)
    rating = jax.block_until_ready(rating)

    ref = neumf_reference(params, user_indices, item_indices)
    assert rating.shape == (batch,), rating.shape
    max_err = float(jnp.max(jnp.abs(rating - ref)))
    assert jnp.allclose(rating, ref, atol=5e-3, rtol=1e-2), ("max_err", max_err)

    print("KERNEL_OK")
</pallas_src>

<mosaic_0001>
module attributes {stable_mosaic.version = 11 : i64} {
  func.func @_neumf_kernel(%arg0: i32, %arg1: memref<256x16xbf16, #tpu.memory_space<vmem>>, %arg2: memref<256x16xbf16, #tpu.memory_space<vmem>>, %arg3: memref<16x32xbf16, #tpu.memory_space<vmem>>, %arg4: memref<16x32xbf16, #tpu.memory_space<vmem>>, %arg5: memref<1x32xf32, #tpu.memory_space<vmem>>, %arg6: memref<32x16xbf16, #tpu.memory_space<vmem>>, %arg7: memref<1x16xf32, #tpu.memory_space<vmem>>, %arg8: memref<16x8xbf16, #tpu.memory_space<vmem>>, %arg9: memref<1x8xf32, #tpu.memory_space<vmem>>, %arg10: memref<1x8xf32, #tpu.memory_space<vmem>>, %arg11: memref<1x16xf32, #tpu.memory_space<vmem>>, %arg12: memref<1x1xf32, #tpu.memory_space<vmem>>, %arg13: memref<1x256xf32, #tpu.memory_space<vmem>>) attributes {dimension_semantics = [#tpu.dimension_semantics<parallel>], iteration_bounds = array<i64: 1>, scalar_prefetch = 0 : i64, scratch_operands = 0 : i64, tpu.core_type = #tpu.core_type<tc>, window_params = [{transform_indices = @transform_0, window_bounds = array<i64: 256, 16>}, {transform_indices = @transform_1, window_bounds = array<i64: 256, 16>}, {pipeline_mode = #tpu.pipeline_mode<synchronous>, transform_indices = @transform_2, window_bounds = array<i64: 16, 32>}, {pipeline_mode = #tpu.pipeline_mode<synchronous>, transform_indices = @transform_3, window_bounds = array<i64: 16, 32>}, {pipeline_mode = #tpu.pipeline_mode<synchronous>, transform_indices = @transform_4, window_bounds = array<i64: 1, 32>}, {pipeline_mode = #tpu.pipeline_mode<synchronous>, transform_indices = @transform_5, window_bounds = array<i64: 32, 16>}, {pipeline_mode = #tpu.pipeline_mode<synchronous>, transform_indices = @transform_6, window_bounds = array<i64: 1, 16>}, {pipeline_mode = #tpu.pipeline_mode<synchronous>, transform_indices = @transform_7, window_bounds = array<i64: 16, 8>}, {pipeline_mode = #tpu.pipeline_mode<synchronous>, transform_indices = @transform_8, window_bounds = array<i64: 1, 8>}, {pipeline_mode = #tpu.pipeline_mode<synchronous>, transform_indices = @transform_9, window_bounds = array<i64: 1, 8>}, {pipeline_mode = #tpu.pipeline_mode<synchronous>, transform_indices = @transform_10, window_bounds = array<i64: 1, 16>}, {pipeline_mode = #tpu.pipeline_mode<synchronous>, transform_indices = @transform_11, window_bounds = array<i64: 1, 1>}, {transform_indices = @transform_12, window_bounds = array<i64: 1, 256>}]} {
    %c0 = arith.constant 0 : index
    %c0_0 = arith.constant 0 : index
    %0 = vector.load %arg1[%c0, %c0_0] : memref<256x16xbf16, #tpu.memory_space<vmem>>, vector<256x16xbf16>
    %c0_1 = arith.constant 0 : index
    %c0_2 = arith.constant 0 : index
    %1 = vector.load %arg2[%c0_1, %c0_2] : memref<256x16xbf16, #tpu.memory_space<vmem>>, vector<256x16xbf16>
    %c0_3 = arith.constant 0 : index
    %c0_4 = arith.constant 0 : index
    %2 = vector.load %arg3[%c0_3, %c0_4] : memref<16x32xbf16, #tpu.memory_space<vmem>>, vector<16x32xbf16>
    %cst = arith.constant dense<0.000000e+00> : vector<256x32xf32>
    %3 = tpu.matmul %0, %2, %cst {dimension_numbers = #tpu.dot_dimension_numbers<[1], [0], [0], [1], [0, 0, 1, 1], [], []>} : vector<256x16xbf16>, vector<16x32xbf16>, vector<256x32xf32> -> vector<256x32xf32>
    %c0_5 = arith.constant 0 : index
    %c0_6 = arith.constant 0 : index
    %4 = vector.load %arg4[%c0_5, %c0_6] : memref<16x32xbf16, #tpu.memory_space<vmem>>, vector<16x32xbf16>
    %cst_7 = arith.constant dense<0.000000e+00> : vector<256x32xf32>
    %5 = tpu.matmul %1, %4, %cst_7 {dimension_numbers = #tpu.dot_dimension_numbers<[1], [0], [0], [1], [0, 0, 1, 1], [], []>} : vector<256x16xbf16>, vector<16x32xbf16>, vector<256x32xf32> -> vector<256x32xf32>
    %6 = arith.addf %3, %5 : vector<256x32xf32>
    %c0_8 = arith.constant 0 : index
    %c0_9 = arith.constant 0 : index
    %7 = vector.load %arg5[%c0_8, %c0_9] : memref<1x32xf32, #tpu.memory_space<vmem>>, vector<1x32xf32>
    %8 = vector.broadcast %7 : vector<1x32xf32> to vector<256x32xf32>
    %9 = arith.addf %6, %8 : vector<256x32xf32>
    %cst_10 = arith.constant 0.000000e+00 : f32
    %10 = vector.broadcast %cst_10 : f32 to vector<256x32xf32>
    %11 = arith.maximumf %9, %10 : vector<256x32xf32>
    %c0_11 = arith.constant 0 : index
    %c0_12 = arith.constant 0 : index
    %12 = vector.load %arg6[%c0_11, %c0_12] : memref<32x16xbf16, #tpu.memory_space<vmem>>, vector<32x16xbf16>
    %c0_13 = arith.constant 0 : index
    %c0_14 = arith.constant 0 : index
    %13 = vector.load %arg7[%c0_13, %c0_14] : memref<1x16xf32, #tpu.memory_space<vmem>>, vector<1x16xf32>
    %14 = arith.truncf %11 : vector<256x32xf32> to vector<256x32xbf16>
    %cst_15 = arith.constant dense<0.000000e+00> : vector<256x16xf32>
    %15 = tpu.matmul %14, %12, %cst_15 {dimension_numbers = #tpu.dot_dimension_numbers<[1], [0], [0], [1], [0, 0, 1, 1], [], []>} : vector<256x32xbf16>, vector<32x16xbf16>, vector<256x16xf32> -> vector<256x16xf32>
    %16 = vector.broadcast %13 : vector<1x16xf32> to vector<256x16xf32>
    %17 = arith.addf %15, %16 : vector<256x16xf32>
    %cst_16 = arith.constant 0.000000e+00 : f32
    %18 = vector.broadcast %cst_16 : f32 to vector<256x16xf32>
    %19 = arith.maximumf %17, %18 : vector<256x16xf32>
    %c0_17 = arith.constant 0 : index
    %c0_18 = arith.constant 0 : index
    %20 = vector.load %arg8[%c0_17, %c0_18] : memref<16x8xbf16, #tpu.memory_space<vmem>>, vector<16x8xbf16>
    %c0_19 = arith.constant 0 : index
    %c0_20 = arith.constant 0 : index
    %21 = vector.load %arg9[%c0_19, %c0_20] : memref<1x8xf32, #tpu.memory_space<vmem>>, vector<1x8xf32>
    %22 = arith.truncf %19 : vector<256x16xf32> to vector<256x16xbf16>
    %cst_21 = arith.constant dense<0.000000e+00> : vector<256x8xf32>
    %23 = tpu.matmul %22, %20, %cst_21 {dimension_numbers = #tpu.dot_dimension_numbers<[1], [0], [0], [1], [0, 0, 1, 1], [], []>} : vector<256x16xbf16>, vector<16x8xbf16>, vector<256x8xf32> -> vector<256x8xf32>
    %24 = vector.broadcast %21 : vector<1x8xf32> to vector<256x8xf32>
    %25 = arith.addf %23, %24 : vector<256x8xf32>
    %cst_22 = arith.constant 0.000000e+00 : f32
    %26 = vector.broadcast %cst_22 : f32 to vector<256x8xf32>
    %27 = arith.maximumf %25, %26 : vector<256x8xf32>
    %28 = arith.extf %0 : vector<256x16xbf16> to vector<256x16xf32>
    %29 = arith.extf %1 : vector<256x16xbf16> to vector<256x16xf32>
    %30 = arith.mulf %28, %29 : vector<256x16xf32>
    %c0_23 = arith.constant 0 : index
    %c0_24 = arith.constant 0 : index
    %31 = vector.load %arg10[%c0_23, %c0_24] : memref<1x8xf32, #tpu.memory_space<vmem>>, vector<1x8xf32>
    %c0_25 = arith.constant 0 : index
    %c0_26 = arith.constant 0 : index
    %32 = vector.load %arg11[%c0_25, %c0_26] : memref<1x16xf32, #tpu.memory_space<vmem>>, vector<1x16xf32>
    %c0_27 = arith.constant 0 : index
    %c0_28 = arith.constant 0 : index
    %33 = vector.load %arg12[%c0_27, %c0_28] : memref<1x1xf32, #tpu.memory_space<vmem>>, vector<1x1xf32>
    %cst_29 = arith.constant dense<0.000000e+00> : vector<1x256xf32>
    %34 = tpu.matmul %31, %27, %cst_29 {dimension_numbers = #tpu.dot_dimension_numbers<[1], [1], [0], [0], [0, 0, 1, 0], [], []>} : vector<1x8xf32>, vector<256x8xf32>, vector<1x256xf32> -> vector<1x256xf32>
    %cst_30 = arith.constant dense<0.000000e+00> : vector<1x256xf32>
    %35 = tpu.matmul %32, %30, %cst_30 {dimension_numbers = #tpu.dot_dimension_numbers<[1], [1], [0], [0], [0, 0, 1, 0], [], []>} : vector<1x16xf32>, vector<256x16xf32>, vector<1x256xf32> -> vector<1x256xf32>
    %36 = arith.addf %34, %35 : vector<1x256xf32>
    %37 = vector.broadcast %33 : vector<1x1xf32> to vector<1x256xf32>
    %38 = arith.addf %36, %37 : vector<1x256xf32>
    %39 = arith.negf %38 : vector<1x256xf32>
    %40 = math.exp %39 : vector<1x256xf32>
    %cst_31 = arith.constant 1.000000e+00 : f32
    %41 = vector.broadcast %cst_31 : f32 to vector<1x256xf32>
    %42 = arith.addf %41, %40 : vector<1x256xf32>
    %43 = arith.divf %41, %42 : vector<1x256xf32>
    %c0_32 = arith.constant 0 : index
    %c0_33 = arith.constant 0 : index
    %44 = vector.load %arg13[%c0_32, %c0_33] : memref<1x256xf32, #tpu.memory_space<vmem>>, vector<1x256xf32>
    tpu.vector_store %arg13[%c0_32, %c0_33], %43 {strides = array<i32>} : memref<1x256xf32, #tpu.memory_space<vmem>>, vector<1x256xf32>,
    return
  }
  func.func @transform_0(%arg0: i32) -> (i32, i32) {
    %c0_i32 = arith.constant 0 : i32
    %c0_i32_0 = arith.constant 0 : i32
    return %arg0, %c0_i32 : i32, i32
  }
  func.func @transform_1(%arg0: i32) -> (i32, i32) {
    %c0_i32 = arith.constant 0 : i32
    %c0_i32_0 = arith.constant 0 : i32
    return %arg0, %c0_i32 : i32, i32
  }
  func.func @transform_2(%arg0: i32) -> (i32, i32) {
    %c0_i32 = arith.constant 0 : i32
    %c0_i32_0 = arith.constant 0 : i32
    %c0_i32_1 = arith.constant 0 : i32
    return %c0_i32, %c0_i32_0 : i32, i32
  }
  func.func @transform_3(%arg0: i32) -> (i32, i32) {
    %c0_i32 = arith.constant 0 : i32
    %c0_i32_0 = arith.constant 0 : i32
    %c0_i32_1 = arith.constant 0 : i32
    return %c0_i32, %c0_i32_0 : i32, i32
  }
  func.func @transform_4(%arg0: i32) -> (i32, i32) {
    %c0_i32 = arith.constant 0 : i32
    %c0_i32_0 = arith.constant 0 : i32
    %c0_i32_1 = arith.constant 0 : i32
    return %c0_i32, %c0_i32_0 : i32, i32
  }
  func.func @transform_5(%arg0: i32) -> (i32, i32) {
    %c0_i32 = arith.constant 0 : i32
    %c0_i32_0 = arith.constant 0 : i32
    %c0_i32_1 = arith.constant 0 : i32
    return %c0_i32, %c0_i32_0 : i32, i32
  }
  func.func @transform_6(%arg0: i32) -> (i32, i32) {
    %c0_i32 = arith.constant 0 : i32
    %c0_i32_0 = arith.constant 0 : i32
    %c0_i32_1 = arith.constant 0 : i32
    return %c0_i32, %c0_i32_0 : i32, i32
  }
  func.func @transform_7(%arg0: i32) -> (i32, i32) {
    %c0_i32 = arith.constant 0 : i32
    %c0_i32_0 = arith.constant 0 : i32
    %c0_i32_1 = arith.constant 0 : i32
    return %c0_i32, %c0_i32_0 : i32, i32
  }
  func.func @transform_8(%arg0: i32) -> (i32, i32) {
    %c0_i32 = arith.constant 0 : i32
    %c0_i32_0 = arith.constant 0 : i32
    %c0_i32_1 = arith.constant 0 : i32
    return %c0_i32, %c0_i32_0 : i32, i32
  }
  func.func @transform_9(%arg0: i32) -> (i32, i32) {
    %c0_i32 = arith.constant 0 : i32
    %c0_i32_0 = arith.constant 0 : i32
    %c0_i32_1 = arith.constant 0 : i32
    return %c0_i32, %c0_i32_0 : i32, i32
  }
  func.func @transform_10(%arg0: i32) -> (i32, i32) {
    %c0_i32 = arith.constant 0 : i32
    %c0_i32_0 = arith.constant 0 : i32
    %c0_i32_1 = arith.constant 0 : i32
    return %c0_i32, %c0_i32_0 : i32, i32
  }
  func.func @transform_11(%arg0: i32) -> (i32, i32) {
    %c0_i32 = arith.constant 0 : i32
    %c0_i32_0 = arith.constant 0 : i32
    %c0_i32_1 = arith.constant 0 : i32
    return %c0_i32, %c0_i32_0 : i32, i32
  }
  func.func @transform_12(%arg0: i32) -> (i32, i32) {
    %c0_i32 = arith.constant 0 : i32
    %c0_i32_0 = arith.constant 0 : i32
    return %c0_i32, %arg0 : i32, i32
  }
}

</mosaic_0001>

<llo_original>
// kernel: tpu_custom_call.1
$region0: #{tpu_custom_call.1}
  #allocation0 [shape = 'u32[]', space=smem, size = 0x4, offset = 0x4, fixed_abs, tag = 'smem constant byte address 0x4 - core index']
  #allocation1 [shape = 'u32[144,128]{1,0:T(1,128)}', space=vmem, size = 0x12000, scoped, tag = 'internal scratch']
  #allocation2 [shape = 'f32[1,1]{1,0:T(1,128)S(1)}', space=vmem, size = 0x200, scoped, tag = 'scoped memory for tpu_custom_call.1']
  %s0 = inlined_call_operand.vmem [shape: bf16[256,16], index: 0, kind: input, shape index: {}]
  %s1 = inlined_call_operand.vmem [shape: bf16[256,16], index: 1, kind: input, shape index: {}]
  %s2 = inlined_call_operand.vmem [shape: bf16[16,32], index: 2, kind: input, shape index: {}]
  %s3 = inlined_call_operand.vmem [shape: bf16[16,32], index: 3, kind: input, shape index: {}]
  %s4 = inlined_call_operand.vmem [shape: f32[1,32], index: 4, kind: input, shape index: {}]
  %s5 = inlined_call_operand.vmem [shape: bf16[32,16], index: 5, kind: input, shape index: {}]
  %s6 = inlined_call_operand.vmem [shape: f32[1,16], index: 6, kind: input, shape index: {}]
  %s7 = inlined_call_operand.vmem [shape: bf16[16,8], index: 7, kind: input, shape index: {}]
  %s8 = inlined_call_operand.vmem [shape: f32[1,8], index: 8, kind: input, shape index: {}]
  %s9 = inlined_call_operand.vmem [shape: f32[1,8], index: 9, kind: input, shape index: {}]
  %s10 = inlined_call_operand.vmem [shape: f32[1,16], index: 10, kind: input, shape index: {}]
  %s11 = inlined_call_operand.<no memory space> [shape: f32[1,1], index: 11, kind: input, shape index: {}]
  %s12 = inlined_call_operand.hbm [shape: f32[1,256], index: 12, kind: output, shape index: {}]
  %s13 = sld [smem:[#allocation0]]
  $region58: #{tpu_custom_call.1} parent=0
    _
  %s15 = ssub.s32 1, %s13
  %s16 = scalar_select 0, %s15, %s13
  %v17 = vstv %s11
  %18 = vst [vmem:[#allocation2] sm:$0x1] %v17
  $region1: #{tpu_custom_call.1} parent=0
    #allocation3 [shape = 'u8[1024]{0}', space=vmem, size = 0x400, scoped, tag = 'output window, operand 0, single buffered']
    #allocation4 [shape = 's32[1]{0}', space=sflag, size = 0x4, scoped, tag = 'scoped memory for tpu_custom_call.1']
    %19 = vsyncpa [#allocation4], 0
    // Predicated region
    $region2: #{tpu_custom_call.1} parent=1 // pred_check
      _
    $region3: #{tpu_custom_call.1} parent=1 // pred_check_branch
      %21 = sbr.rel (0) target = $region5
    $region4: #{tpu_custom_call.1} parent=1 // pred_region
      _
    $region5: #{tpu_custom_call.1} parent=1 // pred_fallthru
      _
    // Predicated region
    $region6: #{tpu_custom_call.1} parent=1 // pred_check
      _
    $region7: #{tpu_custom_call.1} parent=1 // pred_check_branch
      %23 = sbr.rel (0) target = $region9
    $region8: #{tpu_custom_call.1} parent=1 // pred_region
      _
    $region9: #{tpu_custom_call.1} parent=1 // pred_fallthru
      _
    // Predicated region
    $region10: #{tpu_custom_call.1} parent=1 // pred_check
      _
    $region11: #{tpu_custom_call.1} parent=1 // pred_check_branch
      %25 = sbr.rel (0) target = $region13
    $region12: #{tpu_custom_call.1} parent=1 // pred_region
      _
    $region13: #{tpu_custom_call.1} parent=1 // pred_fallthru
      _
    // Predicated region
    $region14: #{tpu_custom_call.1} parent=1 // pred_check
      _
    $region15: #{tpu_custom_call.1} parent=1 // pred_check_branch
      %27 = sbr.rel (0) target = $region17
    $region16: #{tpu_custom_call.1} parent=1 // pred_region
      _
    $region17: #{tpu_custom_call.1} parent=1 // pred_fallthru
      _
    // Predicated region
    $region18: #{tpu_custom_call.1} parent=1 // pred_check
      _
    $region19: #{tpu_custom_call.1} parent=1 // pred_check_branch
      %29 = sbr.rel (0) target = $region21
    $region20: #{tpu_custom_call.1} parent=1 // pred_region
      _
    $region21: #{tpu_custom_call.1} parent=1 // pred_fallthru
      _
    // Predicated region
    $region22: #{tpu_custom_call.1} parent=1 // pred_check
      _
    $region23: #{tpu_custom_call.1} parent=1 // pred_check_branch
      %31 = sbr.rel (0) target = $region25
    $region24: #{tpu_custom_call.1} parent=1 // pred_region
      _
    $region25: #{tpu_custom_call.1} parent=1 // pred_fallthru
      _
    // Predicated region
    $region26: #{tpu_custom_call.1} parent=1 // pred_check
      _
    $region27: #{tpu_custom_call.1} parent=1 // pred_check_branch
      %33 = sbr.rel (0) target = $region29
    $region28: #{tpu_custom_call.1} parent=1 // pred_region
      _
    $region29: #{tpu_custom_call.1} parent=1 // pred_fallthru
      _
    // Predicated region
    $region30: #{tpu_custom_call.1} parent=1 // pred_check
      _
    $region31: #{tpu_custom_call.1} parent=1 // pred_check_branch
      %35 = sbr.rel (0) target = $region33
    $region32: #{tpu_custom_call.1} parent=1 // pred_region
      _
    $region33: #{tpu_custom_call.1} parent=1 // pred_fallthru
      _
    // Predicated region
    $region34: #{tpu_custom_call.1} parent=1 // pred_check
      _
    $region35: #{tpu_custom_call.1} parent=1 // pred_check_branch
      %37 = sbr.rel (0) target = $region37
    $region36: #{tpu_custom_call.1} parent=1 // pred_region
      _
    $region37: #{tpu_custom_call.1} parent=1 // pred_fallthru
      _
    // Predicated region
    $region38: #{tpu_custom_call.1} parent=1 // pred_check
      _
    $region39: #{tpu_custom_call.1} parent=1 // pred_check_branch
      %39 = sbr.rel (0) target = $region41
    $region40: #{tpu_custom_call.1} parent=1 // pred_region
      _
    $region41: #{tpu_custom_call.1} parent=1 // pred_fallthru
      _
    // Predicated region
    $region42: #{tpu_custom_call.1} parent=1 // pred_check
      _
    $region43: #{tpu_custom_call.1} parent=1 // pred_check_branch
      %41 = sbr.rel (0) target = $region45
    $region44: #{tpu_custom_call.1} parent=1 // pred_region
      _
    $region45: #{tpu_custom_call.1} parent=1 // pred_fallthru
      _
    // Predicated region
    $region46: #{tpu_custom_call.1} parent=1 // pred_check
      _
    $region47: #{tpu_custom_call.1} parent=1 // pred_check_branch
      %43 = sbr.rel (0) target = $region49
    $region48: #{tpu_custom_call.1} parent=1 // pred_region
      _
    $region49: #{tpu_custom_call.1} parent=1 // pred_fallthru
      _
    %v45 = vld [vmem:[%s0] sm:$0xf]
    %v46 = vld [vmem:[%s0 + $0x4] sm:$0xf]
    %v47 = vld [vmem:[%s0 + $0x8] sm:$0xf]
    %v48 = vld [vmem:[%s0 + $0xc] sm:$0xf]
    %v49 = vld [vmem:[%s0 + $0x10] sm:$0xf]
    %v50 = vld [vmem:[%s0 + $0x14] sm:$0xf]
    %v51 = vld [vmem:[%s0 + $0x18] sm:$0xf]
    %v52 = vld [vmem:[%s0 + $0x1c] sm:$0xf]
    %v53 = vld [vmem:[%s0 + $0x20] sm:$0xf]
    %v54 = vld [vmem:[%s0 + $0x24] sm:$0xf]
    %v55 = vld [vmem:[%s0 + $0x28] sm:$0xf]
    %v56 = vld [vmem:[%s0 + $0x2c] sm:$0xf]
    %v57 = vld [vmem:[%s0 + $0x30] sm:$0xf]
    %v58 = vld [vmem:[%s0 + $0x34] sm:$0xf]
    %v59 = vld [vmem:[%s0 + $0x38] sm:$0xf]
    %v60 = vld [vmem:[%s0 + $0x3c] sm:$0xf]
    %v61 = vld [vmem:[%s0 + $0x40] sm:$0xf]
    %v62 = vld [vmem:[%s0 + $0x44] sm:$0xf]
    %v63 = vld [vmem:[%s0 + $0x48] sm:$0xf]
    %v64 = vld [vmem:[%s0 + $0x4c] sm:$0xf]
    %v65 = vld [vmem:[%s0 + $0x50] sm:$0xf]
    %v66 = vld [vmem:[%s0 + $0x54] sm:$0xf]
    %v67 = vld [vmem:[%s0 + $0x58] sm:$0xf]
    %v68 = vld [vmem:[%s0 + $0x5c] sm:$0xf]
    %v69 = vld [vmem:[%s0 + $0x60] sm:$0xf]
    %v70 = vld [vmem:[%s0 + $0x64] sm:$0xf]
    %v71 = vld [vmem:[%s0 + $0x68] sm:$0xf]
    %v72 = vld [vmem:[%s0 + $0x6c] sm:$0xf]
    %v73 = vld [vmem:[%s0 + $0x70] sm:$0xf]
    %v74 = vld [vmem:[%s0 + $0x74] sm:$0xf]
    %v75 = vld [vmem:[%s0 + $0x78] sm:$0xf]
    %v76 = vld [vmem:[%s0 + $0x7c] sm:$0xf]
    %v77 = vld [vmem:[%s1] sm:$0xf]
    %v78 = vld [vmem:[%s1 + $0x4] sm:$0xf]
    %v79 = vld [vmem:[%s1 + $0x8] sm:$0xf]
    %v80 = vld [vmem:[%s1 + $0xc] sm:$0xf]
    %v81 = vld [vmem:[%s1 + $0x10] sm:$0xf]
    %v82 = vld [vmem:[%s1 + $0x14] sm:$0xf]
    %v83 = vld [vmem:[%s1 + $0x18] sm:$0xf]
    %v84 = vld [vmem:[%s1 + $0x1c] sm:$0xf]
    %v85 = vld [vmem:[%s1 + $0x20] sm:$0xf]
    %v86 = vld [vmem:[%s1 + $0x24] sm:$0xf]
    %v87 = vld [vmem:[%s1 + $0x28] sm:$0xf]
    %v88 = vld [vmem:[%s1 + $0x2c] sm:$0xf]
    %v89 = vld [vmem:[%s1 + $0x30] sm:$0xf]
    %v90 = vld [vmem:[%s1 + $0x34] sm:$0xf]
    %v91 = vld [vmem:[%s1 + $0x38] sm:$0xf]
    %v92 = vld [vmem:[%s1 + $0x3c] sm:$0xf]
    %v93 = vld [vmem:[%s1 + $0x40] sm:$0xf]
    %v94 = vld [vmem:[%s1 + $0x44] sm:$0xf]
    %v95 = vld [vmem:[%s1 + $0x48] sm:$0xf]
    %v96 = vld [vmem:[%s1 + $0x4c] sm:$0xf]
    %v97 = vld [vmem:[%s1 + $0x50] sm:$0xf]
    %v98 = vld [vmem:[%s1 + $0x54] sm:$0xf]
    %v99 = vld [vmem:[%s1 + $0x58] sm:$0xf]
    %v100 = vld [vmem:[%s1 + $0x5c] sm:$0xf]
    %v101 = vld [vmem:[%s1 + $0x60] sm:$0xf]
    %v102 = vld [vmem:[%s1 + $0x64] sm:$0xf]
    %v103 = vld [vmem:[%s1 + $0x68] sm:$0xf]
    %v104 = vld [vmem:[%s1 + $0x6c] sm:$0xf]
    %v105 = vld [vmem:[%s1 + $0x70] sm:$0xf]
    %v106 = vld [vmem:[%s1 + $0x74] sm:$0xf]
    %v107 = vld [vmem:[%s1 + $0x78] sm:$0xf]
    %v108 = vld [vmem:[%s1 + $0x7c] sm:$0xf]
    %v109 = vld [vmem:[%s2] sm:$0xf]
    %v110 = vld [vmem:[%s2 + $0x4] sm:$0xf]
    %v111 = vld [vmem:[%s3] sm:$0xf]
    %v112 = vld [vmem:[%s3 + $0x4] sm:$0xf]
    %v145 = vunpack.c.l.b16 %v77
    %v146 = vunpack.c.l.b16 %v78
    %v147 = vunpack.c.l.b16 %v79
    %v148 = vunpack.c.l.b16 %v80
    %v149 = vunpack.c.l.b16 %v81
    %v150 = vunpack.c.l.b16 %v82
    %v151 = vunpack.c.l.b16 %v83
    %v152 = vunpack.c.l.b16 %v84
    %v153 = vunpack.c.l.b16 %v85
    %v154 = vunpack.c.l.b16 %v86
    %v155 = vunpack.c.l.b16 %v87
    %v156 = vunpack.c.l.b16 %v88
    %v157 = vunpack.c.l.b16 %v89
    %v158 = vunpack.c.l.b16 %v90
    %v159 = vunpack.c.l.b16 %v91
    %v160 = vunpack.c.l.b16 %v92
    %v161 = vunpack.c.l.b16 %v93
    %v162 = vunpack.c.l.b16 %v94
    %v163 = vunpack.c.l.b16 %v95
    %v164 = vunpack.c.l.b16 %v96
    %v165 = vunpack.c.l.b16 %v97
    %v166 = vunpack.c.l.b16 %v98
    %v167 = vunpack.c.l.b16 %v99
    %v168 = vunpack.c.l.b16 %v100
    %v169 = vunpack.c.l.b16 %v101
    %v170 = vunpack.c.l.b16 %v102
    %v171 = vunpack.c.l.b16 %v103
    %v172 = vunpack.c.l.b16 %v104
    %v173 = vunpack.c.l.b16 %v105
    %v174 = vunpack.c.l.b16 %v106
    %v175 = vunpack.c.l.b16 %v107
    %v176 = vunpack.c.l.b16 %v108
    %v177 = vpack.c.b16 %v146, %v145
    %v178 = vpack.c.b16 %v148, %v147
    %v179 = vpack.c.b16 %v150, %v149
    %v180 = vpack.c.b16 %v152, %v151
    %v181 = vpack.c.b16 %v154, %v153
    %v182 = vpack.c.b16 %v156, %v155
    %v183 = vpack.c.b16 %v158, %v157
    %v184 = vpack.c.b16 %v160, %v159
    %v185 = vpack.c.b16 %v162, %v161
    %v186 = vpack.c.b16 %v164, %v163
    %v187 = vpack.c.b16 %v166, %v165
    %v188 = vpack.c.b16 %v168, %v167
    %v189 = vpack.c.b16 %v170, %v169
    %v190 = vpack.c.b16 %v172, %v171
    %v191 = vpack.c.b16 %v174, %v173
    %v192 = vpack.c.b16 %v176, %v175
    %v195 = vunpack.c.l.b16 %v111
    %v196 = vunpack.c.l.b16 %v112
    %v197 = vpack.c.b16 %v196, %v195
    %vm199 = vcmask 130048
    %v201 = vsel %vm199, %v177, 0
    %v204 = vsel %vm199, %v178, 0
    %v207 = vsel %vm199, %v179, 0
    %v210 = vsel %vm199, %v180, 0
    %v213 = vsel %vm199, %v181, 0
    %v216 = vsel %vm199, %v182, 0
    %v219 = vsel %vm199, %v183, 0
    %v222 = vsel %vm199, %v184, 0
    %v225 = vsel %vm199, %v185, 0
    %v228 = vsel %vm199, %v186, 0
    %v231 = vsel %vm199, %v187, 0
    %v234 = vsel %vm199, %v188, 0
    %v237 = vsel %vm199, %v189, 0
    %v240 = vsel %vm199, %v190, 0
    %v243 = vsel %vm199, %v191, 0
    %v246 = vsel %vm199, %v192, 0
    %248 = vmatprep.subr.bf16.mxu0 0
    %249 = vmatpush1.bf16.msra.mxu0 0
    %250 = vmatprep.subr.bf16.mxu0 0
    %251 = vmatpush1.bf16.msra.mxu0 0
    %252 = vmatprep.subr.bf16.mxu0 0
    %253 = vmatpush1.bf16.msra.mxu0 0
    %254 = vmatprep.subr.bf16.mxu0 0
    %255 = vmatpush1.bf16.msra.mxu0 0
    %256 = vmatprep.subr.bf16.mxu0 0
    %257 = vmatpush1.bf16.msra.mxu0 0
    %258 = vmatprep.subr.bf16.mxu0 0
    %259 = vmatpush1.bf16.msra.mxu0 0
    %260 = vmatprep.subr.bf16.mxu0 0
    %261 = vmatpush1.bf16.msra.mxu0 0
    %262 = vmatprep.subr.bf16.mxu0 0
    %263 = vmatpush1.bf16.msra.mxu0 %v197
    %264 = vmatprep.subr.bf16.mxu0 0
    %265 = vmatpush2.bf16.msra.mxu0 0
    %266 = vmatprep.subr.bf16.mxu0 0
    %267 = vmatpush2.bf16.msra.mxu0 0
    %268 = vmatprep.subr.bf16.mxu0 0
    %269 = vmatpush2.bf16.msra.mxu0 0
    %270 = vmatprep.subr.bf16.mxu0 0
    %271 = vmatpush2.bf16.msra.mxu0 0
    %272 = vmatprep.subr.bf16.mxu0 0
    %273 = vmatpush2.bf16.msra.mxu0 0
    %274 = vmatprep.subr.bf16.mxu0 0
    %275 = vmatpush2.bf16.msra.mxu0 0
    %276 = vmatprep.subr.bf16.mxu0 0
    %277 = vmatpush2.bf16.msra.mxu0 0
    %278 = vmatprep.subr.bf16.mxu0 0
    %279 = vmatpush2.bf16.msra.mxu0 0
    %280 = vmatprep.mubr.bf16.mxu0 0
    %281 = vmatmul.mubr.bf16.gmra.mxu0 %v201
    %v282 = vpop.f32.mrf.mxu0
    %v283 = vadd.f32 0.0, %v282
    %v284 = vpop.f32.mrf.mxu0
    %v285 = vpop.f32.mrf.mxu0
    %v286 = vadd.f32 0.0, %v285
    %v287 = vpop.f32.mrf.mxu0
    %288 = vmatprep.mubr.bf16.mxu0 0
    %289 = vmatmul.mubr.bf16.gmra.mxu0 %v204
    %v290 = vpop.f32.mrf.mxu0
    %v291 = vadd.f32 0.0, %v290
    %v292 = vpop.f32.mrf.mxu0
    %v293 = vpop.f32.mrf.mxu0
    %v294 = vadd.f32 0.0, %v293
    %v295 = vpop.f32.mrf.mxu0
    %296 = vmatprep.mubr.bf16.mxu0 0
    %297 = vmatmul.mubr.bf16.gmra.mxu0 %v207
    %v298 = vpop.f32.mrf.mxu0
    %v299 = vadd.f32 0.0, %v298
    %v300 = vpop.f32.mrf.mxu0
    %v301 = vpop.f32.mrf.mxu0
    %v302 = vadd.f32 0.0, %v301
    %v303 = vpop.f32.mrf.mxu0
    %304 = vmatprep.mubr.bf16.mxu0 0
    %305 = vmatmul.mubr.bf16.gmra.mxu0 %v210
    %v306 = vpop.f32.mrf.mxu0
    %v307 = vadd.f32 0.0, %v306
    %v308 = vpop.f32.mrf.mxu0
    %v309 = vpop.f32.mrf.mxu0
    %v310 = vadd.f32 0.0, %v309
    %v311 = vpop.f32.mrf.mxu0
    %312 = vmatprep.mubr.bf16.mxu0 0
    %313 = vmatmul.mubr.bf16.gmra.mxu0 %v213
    %v314 = vpop.f32.mrf.mxu0
    %v315 = vadd.f32 0.0, %v314
    %v316 = vpop.f32.mrf.mxu0
    %v317 = vpop.f32.mrf.mxu0
    %v318 = vadd.f32 0.0, %v317
    %v319 = vpop.f32.mrf.mxu0
    %320 = vmatprep.mubr.bf16.mxu0 0
    %321 = vmatmul.mubr.bf16.gmra.mxu0 %v216
    %v322 = vpop.f32.mrf.mxu0
    %v323 = vadd.f32 0.0, %v322
    %v324 = vpop.f32.mrf.mxu0
    %v325 = vpop.f32.mrf.mxu0
    %v326 = vadd.f32 0.0, %v325
    %v327 = vpop.f32.mrf.mxu0
    %328 = vmatprep.mubr.bf16.mxu0 0
    %329 = vmatmul.mubr.bf16.gmra.mxu0 %v219
    %v330 = vpop.f32.mrf.mxu0
    %v331 = vadd.f32 0.0, %v330
    %v332 = vpop.f32.mrf.mxu0
    %v333 = vpop.f32.mrf.mxu0
    %v334 = vadd.f32 0.0, %v333
    %v335 = vpop.f32.mrf.mxu0
    %336 = vmatprep.mubr.bf16.mxu0 0
    %337 = vmatmul.mubr.bf16.gmra.mxu0 %v222
    %v338 = vpop.f32.mrf.mxu0
    %v339 = vadd.f32 0.0, %v338
    %v340 = vpop.f32.mrf.mxu0
    %v341 = vpop.f32.mrf.mxu0
    %v342 = vadd.f32 0.0, %v341
    %v343 = vpop.f32.mrf.mxu0
    %344 = vmatprep.mubr.bf16.mxu0 0
    %345 = vmatmul.mubr.bf16.gmra.mxu0 %v225
    %v346 = vpop.f32.mrf.mxu0
    %v347 = vadd.f32 0.0, %v346
    %v348 = vpop.f32.mrf.mxu0
    %v349 = vpop.f32.mrf.mxu0
    %v350 = vadd.f32 0.0, %v349
    %v351 = vpop.f32.mrf.mxu0
    %352 = vmatprep.mubr.bf16.mxu0 0
    %353 = vmatmul.mubr.bf16.gmra.mxu0 %v228
    %v354 = vpop.f32.mrf.mxu0
    %v355 = vadd.f32 0.0, %v354
    %v356 = vpop.f32.mrf.mxu0
    %v357 = vpop.f32.mrf.mxu0
    %v358 = vadd.f32 0.0, %v357
    %v359 = vpop.f32.mrf.mxu0
    %360 = vmatprep.mubr.bf16.mxu0 0
    %361 = vmatmul.mubr.bf16.gmra.mxu0 %v231
    %v362 = vpop.f32.mrf.mxu0
    %v363 = vadd.f32 0.0, %v362
    %v364 = vpop.f32.mrf.mxu0
    %v365 = vpop.f32.mrf.mxu0
    %v366 = vadd.f32 0.0, %v365
    %v367 = vpop.f32.mrf.mxu0
    %368 = vmatprep.mubr.bf16.mxu0 0
    %369 = vmatmul.mubr.bf16.gmra.mxu0 %v234
    %v370 = vpop.f32.mrf.mxu0
    %v371 = vadd.f32 0.0, %v370
    %v372 = vpop.f32.mrf.mxu0
    %v373 = vpop.f32.mrf.mxu0
    %v374 = vadd.f32 0.0, %v373
    %v375 = vpop.f32.mrf.mxu0
    %376 = vmatprep.mubr.bf16.mxu0 0
    %377 = vmatmul.mubr.bf16.gmra.mxu0 %v237
    %v378 = vpop.f32.mrf.mxu0
    %v379 = vadd.f32 0.0, %v378
    %v380 = vpop.f32.mrf.mxu0
    %v381 = vpop.f32.mrf.mxu0
    %v382 = vadd.f32 0.0, %v381
    %v383 = vpop.f32.mrf.mxu0
    %384 = vmatprep.mubr.bf16.mxu0 0
    %385 = vmatmul.mubr.bf16.gmra.mxu0 %v240
    %v386 = vpop.f32.mrf.mxu0
    %v387 = vadd.f32 0.0, %v386
    %v388 = vpop.f32.mrf.mxu0
    %v389 = vpop.f32.mrf.mxu0
    %v390 = vadd.f32 0.0, %v389
    %v391 = vpop.f32.mrf.mxu0
    %392 = vmatprep.mubr.bf16.mxu0 0
    %393 = vmatmul.mubr.bf16.gmra.mxu0 %v243
    %v394 = vpop.f32.mrf.mxu0
    %v395 = vadd.f32 0.0, %v394
    %v396 = vpop.f32.mrf.mxu0
    %v397 = vpop.f32.mrf.mxu0
    %v398 = vadd.f32 0.0, %v397
    %v399 = vpop.f32.mrf.mxu0
    %400 = vmatprep.mubr.bf16.mxu0 0
    %401 = vmatmul.mubr.bf16.gmra.mxu0 %v246
    %v402 = vpop.f32.mrf.mxu0
    %v403 = vadd.f32 0.0, %v402
    %v404 = vpop.f32.mrf.mxu0
    %v405 = vpop.f32.mrf.mxu0
    %v406 = vadd.f32 0.0, %v405
    %v407 = vpop.f32.mrf.mxu0
    %408 = vdwg.mxu0
    %v441 = vunpack.c.l.b16 %v45
    %v442 = vunpack.c.l.b16 %v46
    %v443 = vunpack.c.l.b16 %v47
    %v444 = vunpack.c.l.b16 %v48
    %v445 = vunpack.c.l.b16 %v49
    %v446 = vunpack.c.l.b16 %v50
    %v447 = vunpack.c.l.b16 %v51
    %v448 = vunpack.c.l.b16 %v52
    %v449 = vunpack.c.l.b16 %v53
    %v450 = vunpack.c.l.b16 %v54
    %v451 = vunpack.c.l.b16 %v55
    %v452 = vunpack.c.l.b16 %v56
    %v453 = vunpack.c.l.b16 %v57
    %v454 = vunpack.c.l.b16 %v58
    %v455 = vunpack.c.l.b16 %v59
    %v456 = vunpack.c.l.b16 %v60
    %v457 = vunpack.c.l.b16 %v61
    %v458 = vunpack.c.l.b16 %v62
    %v459 = vunpack.c.l.b16 %v63
    %v460 = vunpack.c.l.b16 %v64
    %v461 = vunpack.c.l.b16 %v65
    %v462 = vunpack.c.l.b16 %v66
    %v463 = vunpack.c.l.b16 %v67
    %v464 = vunpack.c.l.b16 %v68
    %v465 = vunpack.c.l.b16 %v69
    %v466 = vunpack.c.l.b16 %v70
    %v467 = vunpack.c.l.b16 %v71
    %v468 = vunpack.c.l.b16 %v72
    %v469 = vunpack.c.l.b16 %v73
    %v470 = vunpack.c.l.b16 %v74
    %v471 = vunpack.c.l.b16 %v75
    %v472 = vunpack.c.l.b16 %v76
    %v473 = vpack.c.b16 %v442, %v441
    %v474 = vpack.c.b16 %v444, %v443
    %v475 = vpack.c.b16 %v446, %v445
    %v476 = vpack.c.b16 %v448, %v447
    %v477 = vpack.c.b16 %v450, %v449
    %v478 = vpack.c.b16 %v452, %v451
    %v479 = vpack.c.b16 %v454, %v453
    %v480 = vpack.c.b16 %v456, %v455
    %v481 = vpack.c.b16 %v458, %v457
    %v482 = vpack.c.b16 %v460, %v459
    %v483 = vpack.c.b16 %v462, %v461
    %v484 = vpack.c.b16 %v464, %v463
    %v485 = vpack.c.b16 %v466, %v465
    %v486 = vpack.c.b16 %v468, %v467
    %v487 = vpack.c.b16 %v470, %v469
    %v488 = vpack.c.b16 %v472, %v471
    %v491 = vunpack.c.l.b16 %v109
    %v492 = vunpack.c.l.b16 %v110
    %v493 = vpack.c.b16 %v492, %v491
    %v496 = vsel %vm199, %v473, 0
    %v499 = vsel %vm199, %v474, 0
    %v502 = vsel %vm199, %v475, 0
    %v505 = vsel %vm199, %v476, 0
    %v508 = vsel %vm199, %v477, 0
    %v511 = vsel %vm199, %v478, 0
    %v514 = vsel %vm199, %v479, 0
    %v517 = vsel %vm199, %v480, 0
    %v520 = vsel %vm199, %v481, 0
    %v523 = vsel %vm199, %v482, 0
    %v526 = vsel %vm199, %v483, 0
    %v529 = vsel %vm199, %v484, 0
    %v532 = vsel %vm199, %v485, 0
    %v535 = vsel %vm199, %v486, 0
    %v538 = vsel %vm199, %v487, 0
    %v541 = vsel %vm199, %v488, 0
    %543 = vmatprep.subr.bf16.mxu0 0
    %544 = vmatpush1.bf16.msra.mxu0 0
    %545 = vmatprep.subr.bf16.mxu0 0
    %546 = vmatpush1.bf16.msra.mxu0 0
    %547 = vmatprep.subr.bf16.mxu0 0
    %548 = vmatpush1.bf16.msra.mxu0 0
    %549 = vmatprep.subr.bf16.mxu0 0
    %550 = vmatpush1.bf16.msra.mxu0 0
    %551 = vmatprep.subr.bf16.mxu0 0
    %552 = vmatpush1.bf16.msra.mxu0 0
    %553 = vmatprep.subr.bf16.mxu0 0
    %554 = vmatpush1.bf16.msra.mxu0 0
    %555 = vmatprep.subr.bf16.mxu0 0
    %556 = vmatpush1.bf16.msra.mxu0 0
    %557 = vmatprep.subr.bf16.mxu0 0
    %558 = vmatpush1.bf16.msra.mxu0 %v493
    %559 = vmatprep.subr.bf16.mxu0 0
    %560 = vmatpush2.bf16.msra.mxu0 0
    %561 = vmatprep.subr.bf16.mxu0 0
    %562 = vmatpush2.bf16.msra.mxu0 0
    %563 = vmatprep.subr.bf16.mxu0 0
    %564 = vmatpush2.bf16.msra.mxu0 0
    %565 = vmatprep.subr.bf16.mxu0 0
    %566 = vmatpush2.bf16.msra.mxu0 0
    %567 = vmatprep.subr.bf16.mxu0 0
    %568 = vmatpush2.bf16.msra.mxu0 0
    %569 = vmatprep.subr.bf16.mxu0 0
    %570 = vmatpush2.bf16.msra.mxu0 0
    %571 = vmatprep.subr.bf16.mxu0 0
    %572 = vmatpush2.bf16.msra.mxu0 0
    %573 = vmatprep.subr.bf16.mxu0 0
    %574 = vmatpush2.bf16.msra.mxu0 0
    %575 = vmatprep.mubr.bf16.mxu0 0
    %576 = vmatmul.mubr.bf16.gmra.mxu0 %v496
    %v577 = vpop.f32.mrf.mxu0
    %v578 = vadd.f32 %v283, %v577
    %v579 = vpop.f32.mrf.mxu0
    %v580 = vpop.f32.mrf.mxu0
    %v581 = vadd.f32 %v286, %v580
    %v582 = vpop.f32.mrf.mxu0
    %583 = vmatprep.mubr.bf16.mxu0 0
    %584 = vmatmul.mubr.bf16.gmra.mxu0 %v499
    %v585 = vpop.f32.mrf.mxu0
    %v586 = vadd.f32 %v291, %v585
    %v587 = vpop.f32.mrf.mxu0
    %v588 = vpop.f32.mrf.mxu0
    %v589 = vadd.f32 %v294, %v588
    %v590 = vpop.f32.mrf.mxu0
    %591 = vmatprep.mubr.bf16.mxu0 0
    %592 = vmatmul.mubr.bf16.gmra.mxu0 %v502
    %v593 = vpop.f32.mrf.mxu0
    %v594 = vadd.f32 %v299, %v593
    %v595 = vpop.f32.mrf.mxu0
    %v596 = vpop.f32.mrf.mxu0
    %v597 = vadd.f32 %v302, %v596
    %v598 = vpop.f32.mrf.mxu0
    %599 = vmatprep.mubr.bf16.mxu0 0
    %600 = vmatmul.mubr.bf16.gmra.mxu0 %v505
    %v601 = vpop.f32.mrf.mxu0
    %v602 = vadd.f32 %v307, %v601
    %v603 = vpop.f32.mrf.mxu0
    %v604 = vpop.f32.mrf.mxu0
    %v605 = vadd.f32 %v310, %v604
    %v606 = vpop.f32.mrf.mxu0
    %607 = vmatprep.mubr.bf16.mxu0 0
    %608 = vmatmul.mubr.bf16.gmra.mxu0 %v508
    %v609 = vpop.f32.mrf.mxu0
    %v610 = vadd.f32 %v315, %v609
    %v611 = vpop.f32.mrf.mxu0
    %v612 = vpop.f32.mrf.mxu0
    %v613 = vadd.f32 %v318, %v612
    %v614 = vpop.f32.mrf.mxu0
    %615 = vmatprep.mubr.bf16.mxu0 0
    %616 = vmatmul.mubr.bf16.gmra.mxu0 %v511
    %v617 = vpop.f32.mrf.mxu0
    %v618 = vadd.f32 %v323, %v617
    %v619 = vpop.f32.mrf.mxu0
    %v620 = vpop.f32.mrf.mxu0
    %v621 = vadd.f32 %v326, %v620
    %v622 = vpop.f32.mrf.mxu0
    %623 = vmatprep.mubr.bf16.mxu0 0
    %624 = vmatmul.mubr.bf16.gmra.mxu0 %v514
    %v625 = vpop.f32.mrf.mxu0
    %v626 = vadd.f32 %v331, %v625
    %v627 = vpop.f32.mrf.mxu0
    %v628 = vpop.f32.mrf.mxu0
    %v629 = vadd.f32 %v334, %v628
    %v630 = vpop.f32.mrf.mxu0
    %631 = vmatprep.mubr.bf16.mxu0 0
    %632 = vmatmul.mubr.bf16.gmra.mxu0 %v517
    %v633 = vpop.f32.mrf.mxu0
    %v634 = vadd.f32 %v339, %v633
    %v635 = vpop.f32.mrf.mxu0
    %v636 = vpop.f32.mrf.mxu0
    %v637 = vadd.f32 %v342, %v636
    %v638 = vpop.f32.mrf.mxu0
    %639 = vmatprep.mubr.bf16.mxu0 0
    %640 = vmatmul.mubr.bf16.gmra.mxu0 %v520
    %v641 = vpop.f32.mrf.mxu0
    %v642 = vadd.f32 %v347, %v641
    %v643 = vpop.f32.mrf.mxu0
    %v644 = vpop.f32.mrf.mxu0
    %v645 = vadd.f32 %v350, %v644
    %v646 = vpop.f32.mrf.mxu0
    %647 = vmatprep.mubr.bf16.mxu0 0
    %648 = vmatmul.mubr.bf16.gmra.mxu0 %v523
    %v649 = vpop.f32.mrf.mxu0
    %v650 = vadd.f32 %v355, %v649
    %v651 = vpop.f32.mrf.mxu0
    %v652 = vpop.f32.mrf.mxu0
    %v653 = vadd.f32 %v358, %v652
    %v654 = vpop.f32.mrf.mxu0
    %655 = vmatprep.mubr.bf16.mxu0 0
    %656 = vmatmul.mubr.bf16.gmra.mxu0 %v526
    %v657 = vpop.f32.mrf.mxu0
    %v658 = vadd.f32 %v363, %v657
    %v659 = vpop.f32.mrf.mxu0
    %v660 = vpop.f32.mrf.mxu0
    %v661 = vadd.f32 %v366, %v660
    %v662 = vpop.f32.mrf.mxu0
    %663 = vmatprep.mubr.bf16.mxu0 0
    %664 = vmatmul.mubr.bf16.gmra.mxu0 %v529
    %v665 = vpop.f32.mrf.mxu0
    %v666 = vadd.f32 %v371, %v665
    %v667 = vpop.f32.mrf.mxu0
    %v668 = vpop.f32.mrf.mxu0
    %v669 = vadd.f32 %v374, %v668
    %v670 = vpop.f32.mrf.mxu0
    %671 = vmatprep.mubr.bf16.mxu0 0
    %672 = vmatmul.mubr.bf16.gmra.mxu0 %v532
    %v673 = vpop.f32.mrf.mxu0
    %v674 = vadd.f32 %v379, %v673
    %v675 = vpop.f32.mrf.mxu0
    %v676 = vpop.f32.mrf.mxu0
    %v677 = vadd.f32 %v382, %v676
    %v678 = vpop.f32.mrf.mxu0
    %679 = vmatprep.mubr.bf16.mxu0 0
    %680 = vmatmul.mubr.bf16.gmra.mxu0 %v535
    %v681 = vpop.f32.mrf.mxu0
    %v682 = vadd.f32 %v387, %v681
    %v683 = vpop.f32.mrf.mxu0
    %v684 = vpop.f32.mrf.mxu0
    %v685 = vadd.f32 %v390, %v684
    %v686 = vpop.f32.mrf.mxu0
    %687 = vmatprep.mubr.bf16.mxu0 0
    %688 = vmatmul.mubr.bf16.gmra.mxu0 %v538
    %v689 = vpop.f32.mrf.mxu0
    %v690 = vadd.f32 %v395, %v689
    %v691 = vpop.f32.mrf.mxu0
    %v692 = vpop.f32.mrf.mxu0
    %v693 = vadd.f32 %v398, %v692
    %v694 = vpop.f32.mrf.mxu0
    %695 = vmatprep.mubr.bf16.mxu0 0
    %696 = vmatmul.mubr.bf16.gmra.mxu0 %v541
    %v697 = vpop.f32.mrf.mxu0
    %v698 = vadd.f32 %v403, %v697
    %v699 = vpop.f32.mrf.mxu0
    %v700 = vpop.f32.mrf.mxu0
    %v701 = vadd.f32 %v406, %v700
    %v702 = vpop.f32.mrf.mxu0
    %703 = vdwg.mxu0
    %v704 = vld [vmem:[%s4] sm:$0x1]
    %v706 = vlaneseq
    %v707 = vshrl.u32 %v706, 7
    %v708 = vsub.s32 0, %v707
    %v709 = vrot.slane %v704, %v708
    %v711 = vadd.f32 %v578, %v709
    %v712 = vadd.f32 %v581, %v709
    %v713 = vadd.f32 %v586, %v709
    %v714 = vadd.f32 %v589, %v709
    %v715 = vadd.f32 %v594, %v709
    %v716 = vadd.f32 %v597, %v709
    %v717 = vadd.f32 %v602, %v709
    %v718 = vadd.f32 %v605, %v709
    %v719 = vadd.f32 %v610, %v709
    %v720 = vadd.f32 %v613, %v709
    %v721 = vadd.f32 %v618, %v709
    %v722 = vadd.f32 %v621, %v709
    %v723 = vadd.f32 %v626, %v709
    %v724 = vadd.f32 %v629, %v709
    %v725 = vadd.f32 %v634, %v709
    %v726 = vadd.f32 %v637, %v709
    %v727 = vadd.f32 %v642, %v709
    %v728 = vadd.f32 %v645, %v709
    %v729 = vadd.f32 %v650, %v709
    %v730 = vadd.f32 %v653, %v709
    %v731 = vadd.f32 %v658, %v709
    %v732 = vadd.f32 %v661, %v709
    %v733 = vadd.f32 %v666, %v709
    %v734 = vadd.f32 %v669, %v709
    %v735 = vadd.f32 %v674, %v709
    %v736 = vadd.f32 %v677, %v709
    %v737 = vadd.f32 %v682, %v709
    %v738 = vadd.f32 %v685, %v709
    %v739 = vadd.f32 %v690, %v709
    %v740 = vadd.f32 %v693, %v709
    %v741 = vadd.f32 %v698, %v709
    %v742 = vadd.f32 %v701, %v709
    %v743 = vmax.f32 %v711, 0.0
    %v744 = vmax.f32 %v712, 0.0
    %v745 = vmax.f32 %v713, 0.0
    %v746 = vmax.f32 %v714, 0.0
    %v747 = vmax.f32 %v715, 0.0
    %v748 = vmax.f32 %v716, 0.0
    %v749 = vmax.f32 %v717, 0.0
    %v750 = vmax.f32 %v718, 0.0
    %v751 = vmax.f32 %v719, 0.0
    %v752 = vmax.f32 %v720, 0.0
    %v753 = vmax.f32 %v721, 0.0
    %v754 = vmax.f32 %v722, 0.0
    %v755 = vmax.f32 %v723, 0.0
    %v756 = vmax.f32 %v724, 0.0
    %v757 = vmax.f32 %v725, 0.0
    %v758 = vmax.f32 %v726, 0.0
    %v759 = vmax.f32 %v727, 0.0
    %v760 = vmax.f32 %v728, 0.0
    %v761 = vmax.f32 %v729, 0.0
    %v762 = vmax.f32 %v730, 0.0
    %v763 = vmax.f32 %v731, 0.0
    %v764 = vmax.f32 %v732, 0.0
    %v765 = vmax.f32 %v733, 0.0
    %v766 = vmax.f32 %v734, 0.0
    %v767 = vmax.f32 %v735, 0.0
    %v768 = vmax.f32 %v736, 0.0
    %v769 = vmax.f32 %v737, 0.0
    %v770 = vmax.f32 %v738, 0.0
    %v771 = vmax.f32 %v739, 0.0
    %v772 = vmax.f32 %v740, 0.0
    %v773 = vmax.f32 %v741, 0.0
    %v774 = vmax.f32 %v742, 0.0
    %v775 = vld [vmem:[%s5] sm:$0xf]
    %v776 = vld [vmem:[%s5 + $0x4] sm:$0xf]
    %v777 = vld [vmem:[%s5 + $0x8] sm:$0xf]
    %v778 = vld [vmem:[%s5 + $0xc] sm:$0xf]
    %v779 = vld [vmem:[%s6] sm:$0x1]
    %v780 = vpack.c.bf16 %v744, %v743
    %v781 = vpack.c.bf16 %v746, %v745
    %v782 = vpack.c.bf16 %v748, %v747
    %v783 = vpack.c.bf16 %v750, %v749
    %v784 = vpack.c.bf16 %v752, %v751
    %v785 = vpack.c.bf16 %v754, %v753
    %v786 = vpack.c.bf16 %v756, %v755
    %v787 = vpack.c.bf16 %v758, %v757
    %v788 = vpack.c.bf16 %v760, %v759
    %v789 = vpack.c.bf16 %v762, %v761
    %v790 = vpack.c.bf16 %v764, %v763
    %v791 = vpack.c.bf16 %v766, %v765
    %v792 = vpack.c.bf16 %v768, %v767
    %v793 = vpack.c.bf16 %v770, %v769
    %v794 = vpack.c.bf16 %v772, %v771
    %v795 = vpack.c.bf16 %v774, %v773
    %v797 = vlaneseq
    %v798 = vshrl.u32 %v797, 7
    %v799 = vsub.s32 0, %v798
    %v800 = vrot.slane %v779, %v799
    %v806 = vunpack.c.l.b16 %v775
    %v807 = vunpack.c.l.b16 %v776
    %v808 = vunpack.c.l.b16 %v777
    %v809 = vunpack.c.l.b16 %v778
    %v810 = vpack.c.b16 %v807, %v806
    %v811 = vpack.c.b16 %v809, %v808
    %vm814 = vcmask 261120
    %v816 = vsel %vm814, %v780, 0
    %v819 = vsel %vm814, %v781, 0
    %v822 = vsel %vm814, %v782, 0
    %v825 = vsel %vm814, %v783, 0
    %v828 = vsel %vm814, %v784, 0
    %v831 = vsel %vm814, %v785, 0
    %v834 = vsel %vm814, %v786, 0
    %v837 = vsel %vm814, %v787, 0
    %v840 = vsel %vm814, %v788, 0
    %v843 = vsel %vm814, %v789, 0
    %v846 = vsel %vm814, %v790, 0
    %v849 = vsel %vm814, %v791, 0
    %v852 = vsel %vm814, %v792, 0
    %v855 = vsel %vm814, %v793, 0
    %v858 = vsel %vm814, %v794, 0
    %v861 = vsel %vm814, %v795, 0
    %863 = vmatprep.subr.bf16.mxu0 0
    %864 = vmatpush1.bf16.msra.mxu0 0
    %865 = vmatprep.subr.bf16.mxu0 0
    %866 = vmatpush1.bf16.msra.mxu0 0
    %867 = vmatprep.subr.bf16.mxu0 0
    %868 = vmatpush1.bf16.msra.mxu0 0
    %869 = vmatprep.subr.bf16.mxu0 0
    %870 = vmatpush1.bf16.msra.mxu0 0
    %871 = vmatprep.subr.bf16.mxu0 0
    %872 = vmatpush1.bf16.msra.mxu0 0
    %873 = vmatprep.subr.bf16.mxu0 0
    %874 = vmatpush1.bf16.msra.mxu0 0
    %875 = vmatprep.subr.bf16.mxu0 0
    %876 = vmatpush1.bf16.msra.mxu0 %v811
    %877 = vmatprep.subr.bf16.mxu0 0
    %878 = vmatpush1.bf16.msra.mxu0 %v810
    %879 = vmatprep.subr.bf16.mxu0 0
    %880 = vmatpush2.bf16.msra.mxu0 0
    %881 = vmatprep.subr.bf16.mxu0 0
    %882 = vmatpush2.bf16.msra.mxu0 0
    %883 = vmatprep.subr.bf16.mxu0 0
    %884 = vmatpush2.bf16.msra.mxu0 0
    %885 = vmatprep.subr.bf16.mxu0 0
    %886 = vmatpush2.bf16.msra.mxu0 0
    %887 = vmatprep.subr.bf16.mxu0 0
    %888 = vmatpush2.bf16.msra.mxu0 0
    %889 = vmatprep.subr.bf16.mxu0 0
    %890 = vmatpush2.bf16.msra.mxu0 0
    %891 = vmatprep.subr.bf16.mxu0 0
    %892 = vmatpush2.bf16.msra.mxu0 0
    %893 = vmatprep.subr.bf16.mxu0 0
    %894 = vmatpush2.bf16.msra.mxu0 0
    %895 = vmatprep.mubr.bf16.mxu0 0
    %896 = vmatmul.mubr.bf16.gmra.mxu0 %v816
    %v897 = vpop.f32.mrf.mxu0
    %v898 = vadd.f32 %v800, %v897
    %v899 = vpop.f32.mrf.mxu0
    %v900 = vpop.f32.mrf.mxu0
    %v901 = vadd.f32 %v800, %v900
    %v902 = vpop.f32.mrf.mxu0
    %903 = vmatprep.mubr.bf16.mxu0 0
    %904 = vmatmul.mubr.bf16.gmra.mxu0 %v819
    %v905 = vpop.f32.mrf.mxu0
    %v906 = vadd.f32 %v800, %v905
    %v907 = vpop.f32.mrf.mxu0
    %v908 = vpop.f32.mrf.mxu0
    %v909 = vadd.f32 %v800, %v908
    %v910 = vpop.f32.mrf.mxu0
    %911 = vmatprep.mubr.bf16.mxu0 0
    %912 = vmatmul.mubr.bf16.gmra.mxu0 %v822
    %v913 = vpop.f32.mrf.mxu0
    %v914 = vadd.f32 %v800, %v913
    %v915 = vpop.f32.mrf.mxu0
    %v916 = vpop.f32.mrf.mxu0
    %v917 = vadd.f32 %v800, %v916
    %v918 = vpop.f32.mrf.mxu0
    %919 = vmatprep.mubr.bf16.mxu0 0
    %920 = vmatmul.mubr.bf16.gmra.mxu0 %v825
    %v921 = vpop.f32.mrf.mxu0
    %v922 = vadd.f32 %v800, %v921
    %v923 = vpop.f32.mrf.mxu0
    %v924 = vpop.f32.mrf.mxu0
    %v925 = vadd.f32 %v800, %v924
    %v926 = vpop.f32.mrf.mxu0
    %927 = vmatprep.mubr.bf16.mxu0 0
    %928 = vmatmul.mubr.bf16.gmra.mxu0 %v828
    %v929 = vpop.f32.mrf.mxu0
    %v930 = vadd.f32 %v800, %v929
    %v931 = vpop.f32.mrf.mxu0
    %v932 = vpop.f32.mrf.mxu0
    %v933 = vadd.f32 %v800, %v932
    %v934 = vpop.f32.mrf.mxu0
    %935 = vmatprep.mubr.bf16.mxu0 0
    %936 = vmatmul.mubr.bf16.gmra.mxu0 %v831
    %v937 = vpop.f32.mrf.mxu0
    %v938 = vadd.f32 %v800, %v937
    %v939 = vpop.f32.mrf.mxu0
    %v940 = vpop.f32.mrf.mxu0
    %v941 = vadd.f32 %v800, %v940
    %v942 = vpop.f32.mrf.mxu0
    %943 = vmatprep.mubr.bf16.mxu0 0
    %944 = vmatmul.mubr.bf16.gmra.mxu0 %v834
    %v945 = vpop.f32.mrf.mxu0
    %v946 = vadd.f32 %v800, %v945
    %v947 = vpop.f32.mrf.mxu0
    %v948 = vpop.f32.mrf.mxu0
    %v949 = vadd.f32 %v800, %v948
    %v950 = vpop.f32.mrf.mxu0
    %951 = vmatprep.mubr.bf16.mxu0 0
    %952 = vmatmul.mubr.bf16.gmra.mxu0 %v837
    %v953 = vpop.f32.mrf.mxu0
    %v954 = vadd.f32 %v800, %v953
    %v955 = vpop.f32.mrf.mxu0
    %v956 = vpop.f32.mrf.mxu0
    %v957 = vadd.f32 %v800, %v956
    %v958 = vpop.f32.mrf.mxu0
    %959 = vmatprep.mubr.bf16.mxu0 0
    %960 = vmatmul.mubr.bf16.gmra.mxu0 %v840
    %v961 = vpop.f32.mrf.mxu0
    %v962 = vadd.f32 %v800, %v961
    %v963 = vpop.f32.mrf.mxu0
    %v964 = vpop.f32.mrf.mxu0
    %v965 = vadd.f32 %v800, %v964
    %v966 = vpop.f32.mrf.mxu0
    %967 = vmatprep.mubr.bf16.mxu0 0
    %968 = vmatmul.mubr.bf16.gmra.mxu0 %v843
    %v969 = vpop.f32.mrf.mxu0
    %v970 = vadd.f32 %v800, %v969
    %v971 = vpop.f32.mrf.mxu0
    %v972 = vpop.f32.mrf.mxu0
    %v973 = vadd.f32 %v800, %v972
    %v974 = vpop.f32.mrf.mxu0
    %975 = vmatprep.mubr.bf16.mxu0 0
    %976 = vmatmul.mubr.bf16.gmra.mxu0 %v846
    %v977 = vpop.f32.mrf.mxu0
    %v978 = vadd.f32 %v800, %v977
    %v979 = vpop.f32.mrf.mxu0
    %v980 = vpop.f32.mrf.mxu0
    %v981 = vadd.f32 %v800, %v980
    %v982 = vpop.f32.mrf.mxu0
    %983 = vmatprep.mubr.bf16.mxu0 0
    %984 = vmatmul.mubr.bf16.gmra.mxu0 %v849
    %v985 = vpop.f32.mrf.mxu0
    %v986 = vadd.f32 %v800, %v985
    %v987 = vpop.f32.mrf.mxu0
    %v988 = vpop.f32.mrf.mxu0
    %v989 = vadd.f32 %v800, %v988
    %v990 = vpop.f32.mrf.mxu0
    %991 = vmatprep.mubr.bf16.mxu0 0
    %992 = vmatmul.mubr.bf16.gmra.mxu0 %v852
    %v993 = vpop.f32.mrf.mxu0
    %v994 = vadd.f32 %v800, %v993
    %v995 = vpop.f32.mrf.mxu0
    %v996 = vpop.f32.mrf.mxu0
    %v997 = vadd.f32 %v800, %v996
    %v998 = vpop.f32.mrf.mxu0
    %999 = vmatprep.mubr.bf16.mxu0 0
    %1000 = vmatmul.mubr.bf16.gmra.mxu0 %v855
    %v1001 = vpop.f32.mrf.mxu0
    %v1002 = vadd.f32 %v800, %v1001
    %v1003 = vpop.f32.mrf.mxu0
    %v1004 = vpop.f32.mrf.mxu0
    %v1005 = vadd.f32 %v800, %v1004
    %v1006 = vpop.f32.mrf.mxu0
    %1007 = vmatprep.mubr.bf16.mxu0 0
    %1008 = vmatmul.mubr.bf16.gmra.mxu0 %v858
    %v1009 = vpop.f32.mrf.mxu0
    %v1010 = vadd.f32 %v800, %v1009
    %v1011 = vpop.f32.mrf.mxu0
    %v1012 = vpop.f32.mrf.mxu0
    %v1013 = vadd.f32 %v800, %v1012
    %v1014 = vpop.f32.mrf.mxu0
    %1015 = vmatprep.mubr.bf16.mxu0 0
    %1016 = vmatmul.mubr.bf16.gmra.mxu0 %v861
    %v1017 = vpop.f32.mrf.mxu0
    %v1018 = vadd.f32 %v800, %v1017
    %v1019 = vpop.f32.mrf.mxu0
    %v1020 = vpop.f32.mrf.mxu0
    %v1021 = vadd.f32 %v800, %v1020
    %v1022 = vpop.f32.mrf.mxu0
    %1023 = vdwg.mxu0
    %v1024 = vmax.f32 %v898, 0.0
    %v1025 = vmax.f32 %v901, 0.0
    %v1026 = vmax.f32 %v906, 0.0
    %v1027 = vmax.f32 %v909, 0.0
    %v1028 = vmax.f32 %v914, 0.0
    %v1029 = vmax.f32 %v917, 0.0
    %v1030 = vmax.f32 %v922, 0.0
    %v1031 = vmax.f32 %v925, 0.0
    %v1032 = vmax.f32 %v930, 0.0
    %v1033 = vmax.f32 %v933, 0.0
    %v1034 = vmax.f32 %v938, 0.0
    %v1035 = vmax.f32 %v941, 0.0
    %v1036 = vmax.f32 %v946, 0.0
    %v1037 = vmax.f32 %v949, 0.0
    %v1038 = vmax.f32 %v954, 0.0
    %v1039 = vmax.f32 %v957, 0.0
    %v1040 = vmax.f32 %v962, 0.0
    %v1041 = vmax.f32 %v965, 0.0
    %v1042 = vmax.f32 %v970, 0.0
    %v1043 = vmax.f32 %v973, 0.0
    %v1044 = vmax.f32 %v978, 0.0
    %v1045 = vmax.f32 %v981, 0.0
    %v1046 = vmax.f32 %v986, 0.0
    %v1047 = vmax.f32 %v989, 0.0
    %v1048 = vmax.f32 %v994, 0.0
    %v1049 = vmax.f32 %v997, 0.0
    %v1050 = vmax.f32 %v1002, 0.0
    %v1051 = vmax.f32 %v1005, 0.0
    %v1052 = vmax.f32 %v1010, 0.0
    %v1053 = vmax.f32 %v1013, 0.0
    %v1054 = vmax.f32 %v1018, 0.0
    %v1055 = vmax.f32 %v1021, 0.0
    %v1056 = vld [vmem:[%s7] sm:$0xf]
    %v1057 = vld [vmem:[%s7 + $0x4] sm:$0xf]
    %v1058 = vld [vmem:[%s8] sm:$0x1]
    %v1059 = vpack.c.bf16 %v1025, %v1024
    %v1060 = vpack.c.bf16 %v1027, %v1026
    %v1061 = vpack.c.bf16 %v1029, %v1028
    %v1062 = vpack.c.bf16 %v1031, %v1030
    %v1063 = vpack.c.bf16 %v1033, %v1032
    %v1064 = vpack.c.bf16 %v1035, %v1034
    %v1065 = vpack.c.bf16 %v1037, %v1036
    %v1066 = vpack.c.bf16 %v1039, %v1038
    %v1067 = vpack.c.bf16 %v1041, %v1040
    %v1068 = vpack.c.bf16 %v1043, %v1042
    %v1069 = vpack.c.bf16 %v1045, %v1044
    %v1070 = vpack.c.bf16 %v1047, %v1046
    %v1071 = vpack.c.bf16 %v1049, %v1048
    %v1072 = vpack.c.bf16 %v1051, %v1050
    %v1073 = vpack.c.bf16 %v1053, %v1052
    %v1074 = vpack.c.bf16 %v1055, %v1054
    %v1076 = vlaneseq
    %v1077 = vshrl.u32 %v1076, 7
    %v1078 = vsub.s32 0, %v1077
    %v1079 = vrot.slane %v1058, %v1078
    %v1083 = vunpack.c.l.b16 %v1056
    %v1084 = vunpack.c.l.b16 %v1057
    %v1085 = vpack.c.b16 %v1084, %v1083
    %v1088 = vsel %vm199, %v1059, 0
    %v1091 = vsel %vm199, %v1060, 0
    %v1094 = vsel %vm199, %v1061, 0
    %v1097 = vsel %vm199, %v1062, 0
    %v1100 = vsel %vm199, %v1063, 0
    %v1103 = vsel %vm199, %v1064, 0
    %v1106 = vsel %vm199, %v1065, 0
    %v1109 = vsel %vm199, %v1066, 0
    %v1112 = vsel %vm199, %v1067, 0
    %v1115 = vsel %vm199, %v1068, 0
    %v1118 = vsel %vm199, %v1069, 0
    %v1121 = vsel %vm199, %v1070, 0
    %v1124 = vsel %vm199, %v1071, 0
    %v1127 = vsel %vm199, %v1072, 0
    %v1130 = vsel %vm199, %v1073, 0
    %v1133 = vsel %vm199, %v1074, 0
    %1135 = vmatprep.subr.bf16.mxu0 0
    %1136 = vmatpush1.bf16.msra.mxu0 0
    %1137 = vmatprep.subr.bf16.mxu0 0
    %1138 = vmatpush1.bf16.msra.mxu0 0
    %1139 = vmatprep.subr.bf16.mxu0 0
    %1140 = vmatpush1.bf16.msra.mxu0 0
    %1141 = vmatprep.subr.bf16.mxu0 0
    %1142 = vmatpush1.bf16.msra.mxu0 0
    %1143 = vmatprep.subr.bf16.mxu0 0
    %1144 = vmatpush1.bf16.msra.mxu0 0
    %1145 = vmatprep.subr.bf16.mxu0 0
    %1146 = vmatpush1.bf16.msra.mxu0 0
    %1147 = vmatprep.subr.bf16.mxu0 0
    %1148 = vmatpush1.bf16.msra.mxu0 0
    %1149 = vmatprep.subr.bf16.mxu0 0
    %1150 = vmatpush1.bf16.msra.mxu0 %v1085
    %1151 = vmatprep.subr.bf16.mxu0 0
    %1152 = vmatpush2.bf16.msra.mxu0 0
    %1153 = vmatprep.subr.bf16.mxu0 0
    %1154 = vmatpush2.bf16.msra.mxu0 0
    %1155 = vmatprep.subr.bf16.mxu0 0
    %1156 = vmatpush2.bf16.msra.mxu0 0
    %1157 = vmatprep.subr.bf16.mxu0 0
    %1158 = vmatpush2.bf16.msra.mxu0 0
    %1159 = vmatprep.subr.bf16.mxu0 0
    %1160 = vmatpush2.bf16.msra.mxu0 0
    %1161 = vmatprep.subr.bf16.mxu0 0
    %1162 = vmatpush2.bf16.msra.mxu0 0
    %1163 = vmatprep.subr.bf16.mxu0 0
    %1164 = vmatpush2.bf16.msra.mxu0 0
    %1165 = vmatprep.subr.bf16.mxu0 0
    %1166 = vmatpush2.bf16.msra.mxu0 0
    %1167 = vmatprep.mubr.bf16.mxu0 0
    %1168 = vmatmul.mubr.bf16.gmra.mxu0 %v1088
    %v1169 = vpop.f32.mrf.mxu0
    %v1170 = vadd.f32 %v1079, %v1169
    %v1171 = vpop.f32.mrf.mxu0
    %v1172 = vpop.f32.mrf.mxu0
    %v1173 = vadd.f32 %v1079, %v1172
    %v1174 = vpop.f32.mrf.mxu0
    %1175 = vmatprep.mubr.bf16.mxu0 0
    %1176 = vmatmul.mubr.bf16.gmra.mxu0 %v1091
    %v1177 = vpop.f32.mrf.mxu0
    %v1178 = vadd.f32 %v1079, %v1177
    %v1179 = vpop.f32.mrf.mxu0
    %v1180 = vpop.f32.mrf.mxu0
    %v1181 = vadd.f32 %v1079, %v1180
    %v1182 = vpop.f32.mrf.mxu0
    %1183 = vmatprep.mubr.bf16.mxu0 0
    %1184 = vmatmul.mubr.bf16.gmra.mxu0 %v1094
    %v1185 = vpop.f32.mrf.mxu0
    %v1186 = vadd.f32 %v1079, %v1185
    %v1187 = vpop.f32.mrf.mxu0
    %v1188 = vpop.f32.mrf.mxu0
    %v1189 = vadd.f32 %v1079, %v1188
    %v1190 = vpop.f32.mrf.mxu0
    %1191 = vmatprep.mubr.bf16.mxu0 0
    %1192 = vmatmul.mubr.bf16.gmra.mxu0 %v1097
    %v1193 = vpop.f32.mrf.mxu0
    %v1194 = vadd.f32 %v1079, %v1193
    %v1195 = vpop.f32.mrf.mxu0
    %v1196 = vpop.f32.mrf.mxu0
    %v1197 = vadd.f32 %v1079, %v1196
    %v1198 = vpop.f32.mrf.mxu0
    %1199 = vmatprep.mubr.bf16.mxu0 0
    %1200 = vmatmul.mubr.bf16.gmra.mxu0 %v1100
    %v1201 = vpop.f32.mrf.mxu0
    %v1202 = vadd.f32 %v1079, %v1201
    %v1203 = vpop.f32.mrf.mxu0
    %v1204 = vpop.f32.mrf.mxu0
    %v1205 = vadd.f32 %v1079, %v1204
    %v1206 = vpop.f32.mrf.mxu0
    %1207 = vmatprep.mubr.bf16.mxu0 0
    %1208 = vmatmul.mubr.bf16.gmra.mxu0 %v1103
    %v1209 = vpop.f32.mrf.mxu0
    %v1210 = vadd.f32 %v1079, %v1209
    %v1211 = vpop.f32.mrf.mxu0
    %v1212 = vpop.f32.mrf.mxu0
    %v1213 = vadd.f32 %v1079, %v1212
    %v1214 = vpop.f32.mrf.mxu0
    %1215 = vmatprep.mubr.bf16.mxu0 0
    %1216 = vmatmul.mubr.bf16.gmra.mxu0 %v1106
    %v1217 = vpop.f32.mrf.mxu0
    %v1218 = vadd.f32 %v1079, %v1217
    %v1219 = vpop.f32.mrf.mxu0
    %v1220 = vpop.f32.mrf.mxu0
    %v1221 = vadd.f32 %v1079, %v1220
    %v1222 = vpop.f32.mrf.mxu0
    %1223 = vmatprep.mubr.bf16.mxu0 0
    %1224 = vmatmul.mubr.bf16.gmra.mxu0 %v1109
    %v1225 = vpop.f32.mrf.mxu0
    %v1226 = vadd.f32 %v1079, %v1225
    %v1227 = vpop.f32.mrf.mxu0
    %v1228 = vpop.f32.mrf.mxu0
    %v1229 = vadd.f32 %v1079, %v1228
    %v1230 = vpop.f32.mrf.mxu0
    %1231 = vmatprep.mubr.bf16.mxu0 0
    %1232 = vmatmul.mubr.bf16.gmra.mxu0 %v1112
    %v1233 = vpop.f32.mrf.mxu0
    %v1234 = vadd.f32 %v1079, %v1233
    %v1235 = vpop.f32.mrf.mxu0
    %v1236 = vpop.f32.mrf.mxu0
    %v1237 = vadd.f32 %v1079, %v1236
    %v1238 = vpop.f32.mrf.mxu0
    %1239 = vmatprep.mubr.bf16.mxu0 0
    %1240 = vmatmul.mubr.bf16.gmra.mxu0 %v1115
    %v1241 = vpop.f32.mrf.mxu0
    %v1242 = vadd.f32 %v1079, %v1241
    %v1243 = vpop.f32.mrf.mxu0
    %v1244 = vpop.f32.mrf.mxu0
    %v1245 = vadd.f32 %v1079, %v1244
    %v1246 = vpop.f32.mrf.mxu0
    %1247 = vmatprep.mubr.bf16.mxu0 0
    %1248 = vmatmul.mubr.bf16.gmra.mxu0 %v1118
    %v1249 = vpop.f32.mrf.mxu0
    %v1250 = vadd.f32 %v1079, %v1249
    %v1251 = vpop.f32.mrf.mxu0
    %v1252 = vpop.f32.mrf.mxu0
    %v1253 = vadd.f32 %v1079, %v1252
    %v1254 = vpop.f32.mrf.mxu0
    %1255 = vmatprep.mubr.bf16.mxu0 0
    %1256 = vmatmul.mubr.bf16.gmra.mxu0 %v1121
    %v1257 = vpop.f32.mrf.mxu0
    %v1258 = vadd.f32 %v1079, %v1257
    %v1259 = vpop.f32.mrf.mxu0
    %v1260 = vpop.f32.mrf.mxu0
    %v1261 = vadd.f32 %v1079, %v1260
    %v1262 = vpop.f32.mrf.mxu0
    %1263 = vmatprep.mubr.bf16.mxu0 0
    %1264 = vmatmul.mubr.bf16.gmra.mxu0 %v1124
    %v1265 = vpop.f32.mrf.mxu0
    %v1266 = vadd.f32 %v1079, %v1265
    %v1267 = vpop.f32.mrf.mxu0
    %v1268 = vpop.f32.mrf.mxu0
    %v1269 = vadd.f32 %v1079, %v1268
    %v1270 = vpop.f32.mrf.mxu0
    %1271 = vmatprep.mubr.bf16.mxu0 0
    %1272 = vmatmul.mubr.bf16.gmra.mxu0 %v1127
    %v1273 = vpop.f32.mrf.mxu0
    %v1274 = vadd.f32 %v1079, %v1273
    %v1275 = vpop.f32.mrf.mxu0
    %v1276 = vpop.f32.mrf.mxu0
    %v1277 = vadd.f32 %v1079, %v1276
    %v1278 = vpop.f32.mrf.mxu0
    %1279 = vmatprep.mubr.bf16.mxu0 0
    %1280 = vmatmul.mubr.bf16.gmra.mxu0 %v1130
    %v1281 = vpop.f32.mrf.mxu0
    %v1282 = vadd.f32 %v1079, %v1281
    %v1283 = vpop.f32.mrf.mxu0
    %v1284 = vpop.f32.mrf.mxu0
    %v1285 = vadd.f32 %v1079, %v1284
    %v1286 = vpop.f32.mrf.mxu0
    %1287 = vmatprep.mubr.bf16.mxu0 0
    %1288 = vmatmul.mubr.bf16.gmra.mxu0 %v1133
    %v1289 = vpop.f32.mrf.mxu0
    %v1290 = vadd.f32 %v1079, %v1289
    %v1291 = vpop.f32.mrf.mxu0
    %v1292 = vpop.f32.mrf.mxu0
    %v1293 = vadd.f32 %v1079, %v1292
    %v1294 = vpop.f32.mrf.mxu0
    %1295 = vdwg.mxu0
    %v1296 = vmax.f32 %v1170, 0.0
    %v1297 = vmax.f32 %v1173, 0.0
    %v1298 = vmax.f32 %v1178, 0.0
    %v1299 = vmax.f32 %v1181, 0.0
    %v1300 = vmax.f32 %v1186, 0.0
    %v1301 = vmax.f32 %v1189, 0.0
    %v1302 = vmax.f32 %v1194, 0.0
    %v1303 = vmax.f32 %v1197, 0.0
    %v1304 = vmax.f32 %v1202, 0.0
    %v1305 = vmax.f32 %v1205, 0.0
    %v1306 = vmax.f32 %v1210, 0.0
    %v1307 = vmax.f32 %v1213, 0.0
    %v1308 = vmax.f32 %v1218, 0.0
    %v1309 = vmax.f32 %v1221, 0.0
    %v1310 = vmax.f32 %v1226, 0.0
    %v1311 = vmax.f32 %v1229, 0.0
    %v1312 = vmax.f32 %v1234, 0.0
    %v1313 = vmax.f32 %v1237, 0.0
    %v1314 = vmax.f32 %v1242, 0.0
    %v1315 = vmax.f32 %v1245, 0.0
    %v1316 = vmax.f32 %v1250, 0.0
    %v1317 = vmax.f32 %v1253, 0.0
    %v1318 = vmax.f32 %v1258, 0.0
    %v1319 = vmax.f32 %v1261, 0.0
    %v1320 = vmax.f32 %v1266, 0.0
    %v1321 = vmax.f32 %v1269, 0.0
    %v1322 = vmax.f32 %v1274, 0.0
    %v1323 = vmax.f32 %v1277, 0.0
    %v1324 = vmax.f32 %v1282, 0.0
    %v1325 = vmax.f32 %v1285, 0.0
    %v1326 = vmax.f32 %v1290, 0.0
    %v1327 = vmax.f32 %v1293, 0.0
    %v1328 = vunpack.c.l.bf16 %v45
    %v1329 = vunpack.c.l.bf16 %v46
    %v1330 = vunpack.c.l.bf16 %v47
    %v1331 = vunpack.c.l.bf16 %v48
    %v1332 = vunpack.c.l.bf16 %v49
    %v1333 = vunpack.c.l.bf16 %v50
    %v1334 = vunpack.c.l.bf16 %v51
    %v1335 = vunpack.c.l.bf16 %v52
    %v1336 = vunpack.c.l.bf16 %v53
    %v1337 = vunpack.c.l.bf16 %v54
    %v1338 = vunpack.c.l.bf16 %v55
    %v1339 = vunpack.c.l.bf16 %v56
    %v1340 = vunpack.c.l.bf16 %v57
    %v1341 = vunpack.c.l.bf16 %v58
    %v1342 = vunpack.c.l.bf16 %v59
    %v1343 = vunpack.c.l.bf16 %v60
    %v1344 = vunpack.c.l.bf16 %v61
    %v1345 = vunpack.c.l.bf16 %v62
    %v1346 = vunpack.c.l.bf16 %v63
    %v1347 = vunpack.c.l.bf16 %v64
    %v1348 = vunpack.c.l.bf16 %v65
    %v1349 = vunpack.c.l.bf16 %v66
    %v1350 = vunpack.c.l.bf16 %v67
    %v1351 = vunpack.c.l.bf16 %v68
    %v1352 = vunpack.c.l.bf16 %v69
    %v1353 = vunpack.c.l.bf16 %v70
    %v1354 = vunpack.c.l.bf16 %v71
    %v1355 = vunpack.c.l.bf16 %v72
    %v1356 = vunpack.c.l.bf16 %v73
    %v1357 = vunpack.c.l.bf16 %v74
    %v1358 = vunpack.c.l.bf16 %v75
    %v1359 = vunpack.c.l.bf16 %v76
    %v1360 = vunpack.c.l.bf16 %v77
    %v1361 = vunpack.c.l.bf16 %v78
    %v1362 = vunpack.c.l.bf16 %v79
    %v1363 = vunpack.c.l.bf16 %v80
    %v1364 = vunpack.c.l.bf16 %v81
    %v1365 = vunpack.c.l.bf16 %v82
    %v1366 = vunpack.c.l.bf16 %v83
    %v1367 = vunpack.c.l.bf16 %v84
    %v1368 = vunpack.c.l.bf16 %v85
    %v1369 = vunpack.c.l.bf16 %v86
    %v1370 = vunpack.c.l.bf16 %v87
    %v1371 = vunpack.c.l.bf16 %v88
    %v1372 = vunpack.c.l.bf16 %v89
    %v1373 = vunpack.c.l.bf16 %v90
    %v1374 = vunpack.c.l.bf16 %v91
    %v1375 = vunpack.c.l.bf16 %v92
    %v1376 = vunpack.c.l.bf16 %v93
    %v1377 = vunpack.c.l.bf16 %v94
    %v1378 = vunpack.c.l.bf16 %v95
    %v1379 = vunpack.c.l.bf16 %v96
    %v1380 = vunpack.c.l.bf16 %v97
    %v1381 = vunpack.c.l.bf16 %v98
    %v1382 = vunpack.c.l.bf16 %v99
    %v1383 = vunpack.c.l.bf16 %v100
    %v1384 = vunpack.c.l.bf16 %v101
    %v1385 = vunpack.c.l.bf16 %v102
    %v1386 = vunpack.c.l.bf16 %v103
    %v1387 = vunpack.c.l.bf16 %v104
    %v1388 = vunpack.c.l.bf16 %v105
    %v1389 = vunpack.c.l.bf16 %v106
    %v1390 = vunpack.c.l.bf16 %v107
    %v1391 = vunpack.c.l.bf16 %v108
    %v1392 = vmul.f32 %v1328, %v1360
    %v1393 = vmul.f32 %v1329, %v1361
    %v1394 = vmul.f32 %v1330, %v1362
    %v1395 = vmul.f32 %v1331, %v1363
    %v1396 = vmul.f32 %v1332, %v1364
    %v1397 = vmul.f32 %v1333, %v1365
    %v1398 = vmul.f32 %v1334, %v1366
    %v1399 = vmul.f32 %v1335, %v1367
    %v1400 = vmul.f32 %v1336, %v1368
    %v1401 = vmul.f32 %v1337, %v1369
    %v1402 = vmul.f32 %v1338, %v1370
    %v1403 = vmul.f32 %v1339, %v1371
    %v1404 = vmul.f32 %v1340, %v1372
    %v1405 = vmul.f32 %v1341, %v1373
    %v1406 = vmul.f32 %v1342, %v1374
    %v1407 = vmul.f32 %v1343, %v1375
    %v1408 = vmul.f32 %v1344, %v1376
    %v1409 = vmul.f32 %v1345, %v1377
    %v1410 = vmul.f32 %v1346, %v1378
    %v1411 = vmul.f32 %v1347, %v1379
    %v1412 = vmul.f32 %v1348, %v1380
    %v1413 = vmul.f32 %v1349, %v1381
    %v1414 = vmul.f32 %v1350, %v1382
    %v1415 = vmul.f32 %v1351, %v1383
    %v1416 = vmul.f32 %v1352, %v1384
    %v1417 = vmul.f32 %v1353, %v1385
    %v1418 = vmul.f32 %v1354, %v1386
    %v1419 = vmul.f32 %v1355, %v1387
    %v1420 = vmul.f32 %v1356, %v1388
    %v1421 = vmul.f32 %v1357, %v1389
    %v1422 = vmul.f32 %v1358, %v1390
    %v1423 = vmul.f32 %v1359, %v1391
    %v1424 = vld [vmem:[%s9] sm:$0x1]
    %v1425 = vld [vmem:[%s10] sm:$0x1]
    %v1426 = vld [vmem:[#allocation2] sm:$0x1]
    %v1428 = vsel %vm199, %v1425, 0
    %v1431 = vsel %vm199, %v1392, 0
    %v1434 = vsel %vm199, %v1393, 0
    %v1437 = vsel %vm199, %v1394, 0
    %v1440 = vsel %vm199, %v1395, 0
    %v1443 = vsel %vm199, %v1396, 0
    %v1446 = vsel %vm199, %v1397, 0
    %v1449 = vsel %vm199, %v1398, 0
    %v1452 = vsel %vm199, %v1399, 0
    %v1455 = vsel %vm199, %v1400, 0
    %v1458 = vsel %vm199, %v1401, 0
    %v1461 = vsel %vm199, %v1402, 0
    %v1464 = vsel %vm199, %v1403, 0
    %v1467 = vsel %vm199, %v1404, 0
    %v1470 = vsel %vm199, %v1405, 0
    %v1473 = vsel %vm199, %v1406, 0
    %v1476 = vsel %vm199, %v1407, 0
    %v1479 = vsel %vm199, %v1408, 0
    %v1482 = vsel %vm199, %v1409, 0
    %v1485 = vsel %vm199, %v1410, 0
    %v1488 = vsel %vm199, %v1411, 0
    %v1491 = vsel %vm199, %v1412, 0
    %v1494 = vsel %vm199, %v1413, 0
    %v1497 = vsel %vm199, %v1414, 0
    %v1500 = vsel %vm199, %v1415, 0
    %v1503 = vsel %vm199, %v1416, 0
    %v1506 = vsel %vm199, %v1417, 0
    %v1509 = vsel %vm199, %v1418, 0
    %v1512 = vsel %vm199, %v1419, 0
    %v1515 = vsel %vm199, %v1420, 0
    %v1518 = vsel %vm199, %v1421, 0
    %v1521 = vsel %vm199, %v1422, 0
    %v1524 = vsel %vm199, %v1423, 0
    %1526 = vmatprep.subr.mxu0 0.0
    %1527 = vmatpush1.xpose.msra.mxu0 %v1476
    %1528 = vmatprep.subr.mxu0 0.0
    %1529 = vmatpush1.xpose.msra.mxu0 %v1473
    %1530 = vmatprep.subr.mxu0 0.0
    %1531 = vmatpush1.xpose.msra.mxu0 %v1470
    %1532 = vmatprep.subr.mxu0 0.0
    %1533 = vmatpush1.xpose.msra.mxu0 %v1467
    %1534 = vmatprep.subr.mxu0 0.0
    %1535 = vmatpush1.xpose.msra.mxu0 %v1464
    %1536 = vmatprep.subr.mxu0 0.0
    %1537 = vmatpush1.xpose.msra.mxu0 %v1461
    %1538 = vmatprep.subr.mxu0 0.0
    %1539 = vmatpush1.xpose.msra.mxu0 %v1458
    %1540 = vmatprep.subr.mxu0 0.0
    %1541 = vmatpush1.xpose.msra.mxu0 %v1455
    %1542 = vmatprep.subr.mxu0 0.0
    %1543 = vmatpush1.xpose.msra.mxu0 %v1452
    %1544 = vmatprep.subr.mxu0 0.0
    %1545 = vmatpush1.xpose.msra.mxu0 %v1449
    %1546 = vmatprep.subr.mxu0 0.0
    %1547 = vmatpush1.xpose.msra.mxu0 %v1446
    %1548 = vmatprep.subr.mxu0 0.0
    %1549 = vmatpush1.xpose.msra.mxu0 %v1443
    %1550 = vmatprep.subr.mxu0 0.0
    %1551 = vmatpush1.xpose.msra.mxu0 %v1440
    %1552 = vmatprep.subr.mxu0 0.0
    %1553 = vmatpush1.xpose.msra.mxu0 %v1437
    %1554 = vmatprep.subr.mxu0 0.0
    %1555 = vmatpush1.xpose.msra.mxu0 %v1434
    %1556 = vmatprep.subr.mxu0 0.0
    %1557 = vmatpush1.xpose.msra.mxu0 %v1431
    %1558 = vmatprep.subr.mxu0 0.0
    %1559 = vmatpush2.xpose.msra.mxu0 %v1524
    %1560 = vmatprep.subr.mxu0 0.0
    %1561 = vmatpush2.xpose.msra.mxu0 %v1521
    %1562 = vmatprep.subr.mxu0 0.0
    %1563 = vmatpush2.xpose.msra.mxu0 %v1518
    %1564 = vmatprep.subr.mxu0 0.0
    %1565 = vmatpush2.xpose.msra.mxu0 %v1515
    %1566 = vmatprep.subr.mxu0 0.0
    %1567 = vmatpush2.xpose.msra.mxu0 %v1512
    %1568 = vmatprep.subr.mxu0 0.0
    %1569 = vmatpush2.xpose.msra.mxu0 %v1509
    %1570 = vmatprep.subr.mxu0 0.0
    %1571 = vmatpush2.xpose.msra.mxu0 %v1506
    %1572 = vmatprep.subr.mxu0 0.0
    %1573 = vmatpush2.xpose.msra.mxu0 %v1503
    %1574 = vmatprep.subr.mxu0 0.0
    %1575 = vmatpush2.xpose.msra.mxu0 %v1500
    %1576 = vmatprep.subr.mxu0 0.0
    %1577 = vmatpush2.xpose.msra.mxu0 %v1497
    %1578 = vmatprep.subr.mxu0 0.0
    %1579 = vmatpush2.xpose.msra.mxu0 %v1494
    %1580 = vmatprep.subr.mxu0 0.0
    %1581 = vmatpush2.xpose.msra.mxu0 %v1491
    %1582 = vmatprep.subr.mxu0 0.0
    %1583 = vmatpush2.xpose.msra.mxu0 %v1488
    %1584 = vmatprep.subr.mxu0 0.0
    %1585 = vmatpush2.xpose.msra.mxu0 %v1485
    %1586 = vmatprep.subr.mxu0 0.0
    %1587 = vmatpush2.xpose.msra.mxu0 %v1482
    %1588 = vmatprep.subr.mxu0 0.0
    %1589 = vmatpush2.xpose.msra.mxu0 %v1479
    %1590 = vmatprep.mubr.f32.mxu0 0.0
    %1591 = vmatmul.mubr.f32.gmra.mxu0 %v1428
    %v1592 = vpop.f32.mrf.mxu0
    %v1593 = vadd.f32 0.0, %v1592
    %v1594 = vpop.f32.mrf.mxu0
    %v1595 = vadd.f32 0.0, %v1594
    %1596 = vdwg.mxu0
    %vm1597 = vcmask 64512
    %v1599 = vsel %vm1597, %v1424, 0
    %v1602 = vsel %vm1597, %v1296, 0
    %v1605 = vsel %vm1597, %v1297, 0
    %v1608 = vsel %vm1597, %v1298, 0
    %v1611 = vsel %vm1597, %v1299, 0
    %v1614 = vsel %vm1597, %v1300, 0
    %v1617 = vsel %vm1597, %v1301, 0
    %v1620 = vsel %vm1597, %v1302, 0
    %v1623 = vsel %vm1597, %v1303, 0
    %v1626 = vsel %vm1597, %v1304, 0
    %v1629 = vsel %vm1597, %v1305, 0
    %v1632 = vsel %vm1597, %v1306, 0
    %v1635 = vsel %vm1597, %v1307, 0
    %v1638 = vsel %vm1597, %v1308, 0
    %v1641 = vsel %vm1597, %v1309, 0
    %v1644 = vsel %vm1597, %v1310, 0
    %v1647 = vsel %vm1597, %v1311, 0
    %v1650 = vsel %vm1597, %v1312, 0
    %v1653 = vsel %vm1597, %v1313, 0
    %v1656 = vsel %vm1597, %v1314, 0
    %v1659 = vsel %vm1597, %v1315, 0
    %v1662 = vsel %vm1597, %v1316, 0
    %v1665 = vsel %vm1597, %v1317, 0
    %v1668 = vsel %vm1597, %v1318, 0
    %v1671 = vsel %vm1597, %v1319, 0
    %v1674 = vsel %vm1597, %v1320, 0
    %v1677 = vsel %vm1597, %v1321, 0
    %v1680 = vsel %vm1597, %v1322, 0
    %v1683 = vsel %vm1597, %v1323, 0
    %v1686 = vsel %vm1597, %v1324, 0
    %v1689 = vsel %vm1597, %v1325, 0
    %v1692 = vsel %vm1597, %v1326, 0
    %v1695 = vsel %vm1597, %v1327, 0
    %1697 = vmatprep.subr.mxu0 0.0
    %1698 = vmatpush1.xpose.msra.mxu0 %v1647
    %1699 = vmatprep.subr.mxu0 0.0
    %1700 = vmatpush1.xpose.msra.mxu0 %v1644
    %1701 = vmatprep.subr.mxu0 0.0
    %1702 = vmatpush1.xpose.msra.mxu0 %v1641
    %1703 = vmatprep.subr.mxu0 0.0
    %1704 = vmatpush1.xpose.msra.mxu0 %v1638
    %1705 = vmatprep.subr.mxu0 0.0
    %1706 = vmatpush1.xpose.msra.mxu0 %v1635
    %1707 = vmatprep.subr.mxu0 0.0
    %1708 = vmatpush1.xpose.msra.mxu0 %v1632
    %1709 = vmatprep.subr.mxu0 0.0
    %1710 = vmatpush1.xpose.msra.mxu0 %v1629
    %1711 = vmatprep.subr.mxu0 0.0
    %1712 = vmatpush1.xpose.msra.mxu0 %v1626
    %1713 = vmatprep.subr.mxu0 0.0
    %1714 = vmatpush1.xpose.msra.mxu0 %v1623
    %1715 = vmatprep.subr.mxu0 0.0
    %1716 = vmatpush1.xpose.msra.mxu0 %v1620
    %1717 = vmatprep.subr.mxu0 0.0
    %1718 = vmatpush1.xpose.msra.mxu0 %v1617
    %1719 = vmatprep.subr.mxu0 0.0
    %1720 = vmatpush1.xpose.msra.mxu0 %v1614
    %1721 = vmatprep.subr.mxu0 0.0
    %1722 = vmatpush1.xpose.msra.mxu0 %v1611
    %1723 = vmatprep.subr.mxu0 0.0
    %1724 = vmatpush1.xpose.msra.mxu0 %v1608
    %1725 = vmatprep.subr.mxu0 0.0
    %1726 = vmatpush1.xpose.msra.mxu0 %v1605
    %1727 = vmatprep.subr.mxu0 0.0
    %1728 = vmatpush1.xpose.msra.mxu0 %v1602
    %1729 = vmatprep.subr.mxu0 0.0
    %1730 = vmatpush2.xpose.msra.mxu0 %v1695
    %1731 = vmatprep.subr.mxu0 0.0
    %1732 = vmatpush2.xpose.msra.mxu0 %v1692
    %1733 = vmatprep.subr.mxu0 0.0
    %1734 = vmatpush2.xpose.msra.mxu0 %v1689
    %1735 = vmatprep.subr.mxu0 0.0
    %1736 = vmatpush2.xpose.msra.mxu0 %v1686
    %1737 = vmatprep.subr.mxu0 0.0
    %1738 = vmatpush2.xpose.msra.mxu0 %v1683
    %1739 = vmatprep.subr.mxu0 0.0
    %1740 = vmatpush2.xpose.msra.mxu0 %v1680
    %1741 = vmatprep.subr.mxu0 0.0
    %1742 = vmatpush2.xpose.msra.mxu0 %v1677
    %1743 = vmatprep.subr.mxu0 0.0
    %1744 = vmatpush2.xpose.msra.mxu0 %v1674
    %1745 = vmatprep.subr.mxu0 0.0
    %1746 = vmatpush2.xpose.msra.mxu0 %v1671
    %1747 = vmatprep.subr.mxu0 0.0
    %1748 = vmatpush2.xpose.msra.mxu0 %v1668
    %1749 = vmatprep.subr.mxu0 0.0
    %1750 = vmatpush2.xpose.msra.mxu0 %v1665
    %1751 = vmatprep.subr.mxu0 0.0
    %1752 = vmatpush2.xpose.msra.mxu0 %v1662
    %1753 = vmatprep.subr.mxu0 0.0
    %1754 = vmatpush2.xpose.msra.mxu0 %v1659
    %1755 = vmatprep.subr.mxu0 0.0
    %1756 = vmatpush2.xpose.msra.mxu0 %v1656
    %1757 = vmatprep.subr.mxu0 0.0
    %1758 = vmatpush2.xpose.msra.mxu0 %v1653
    %1759 = vmatprep.subr.mxu0 0.0
    %1760 = vmatpush2.xpose.msra.mxu0 %v1650
    %1761 = vmatprep.mubr.f32.mxu0 0.0
    %1762 = vmatmul.mubr.f32.gmra.mxu0 %v1599
    %v1763 = vpop.f32.mrf.mxu0
    %v1764 = vadd.f32 %v1593, %v1763
    %v1765 = vpop.f32.mrf.mxu0
    %v1766 = vadd.f32 %v1595, %v1765
    %1767 = vdwg.mxu0
    %1769 = vset.pattern.permute.xlu0 0
    %1770 = vperm.xlu0 %1769, %v1426
    %v1771 = vpop.permute.xlu0 %1770
    %v1773 = vlaneseq
    %v1774 = vshrl.u32 %v1773, 7
    %v1775 = vsub.s32 0, %v1774
    %v1776 = vrot.slane %v1771, %v1775
    %v1777 = vadd.f32 %v1764, %v1776
    %v1778 = vadd.f32 %v1766, %v1776
    %v1779 = vxor.u32 %v1777, 2147483648
    %v1780 = vxor.u32 %v1778, 2147483648
    %v1781 = vmul.f32 %v1779, 1.442695
    %v1782 = vpow.pop %v1781
    %v1783 = vmul.f32 %v1780, 1.442695
    %v1784 = vpow.pop %v1783
    %v1785 = vadd.f32 %v1782, 1.0
    %v1786 = vadd.f32 %v1784, 1.0
    %v1787 = vrcp.pop %v1785
    %v1788 = vmul.f32 1.0, %v1787
    %v1789 = vrcp.pop %v1786
    %v1790 = vmul.f32 1.0, %v1789
    %v1793 = vcombine.low %v1788, %v1790
    %v1795 = vunpack.c.l.s4 1966171168
    %v1796 = vunpack.c.0.s8 %v1795
    %v1797 = vlaneseq
    %v1798 = vshrl.u32 %v1797, 7
    %v1799 = vsub.s32 %v1796, %v1798
    %v1800 = vrot.slane %v1793, %v1799
    %v1802 = vunpack.c.l.s4 1966171168
    %v1803 = vunpack.c.0.s8 %v1802
    %v1804 = vlaneseq
    %v1805 = vshrl.u32 %v1804, 7
    %v1806 = vsub.s32 %v1803, %v1805
    %v1807 = vrot.slane %v1800, %v1806
    %v1809 = vlaneseq
    %vm1810 = vcmp.ge.s32.totalorder %v1809, 0
    %vm1811 = vcmp.lt.s32.totalorder %v1809, 256
    %vm1812 = vmand %vm1810, %vm1811
    %1813 = vst.msk [vmem:[#allocation3] sm:$0x3] %vm1812, %v1807
    // Predicated region
    $region50: #{tpu_custom_call.1} parent=1 // pred_check
      _
    $region51: #{tpu_custom_call.1} parent=1 // pred_check_branch
      %1815 = sbr.rel (0) target = $region53
    $region52: #{tpu_custom_call.1} parent=1 // pred_region
      %s1817 = ssub.s32 32, 32
      %1818 = vsyncadd [#allocation4], %s1817
      %s1820 = sshll.u32 [#allocation3], 4
      %s1821 = int_to_ptr.vmem [resolvable:$true] %s1820
      %1823 = dma.vmem_to_hbm [thread:$0]  %s1821, 32, %s12, [#allocation4]
    $region53: #{tpu_custom_call.1} parent=1 // pred_fallthru
      _
    // Predicated region
    $region54: #{tpu_custom_call.1} parent=1 // pred_check
      _
    $region55: #{tpu_custom_call.1} parent=1 // pred_check_branch
      %1825 = sbr.rel (0) target = $region57
    $region56: #{tpu_custom_call.1} parent=1 // pred_region
      %1826 = dma.done [#allocation4], 32
    $region57: #{tpu_custom_call.1} parent=1 // pred_fallthru
      _
    %1827 = vsyncpa [#allocation4], 1

</llo_original>
